<compile_context>
chip_gen: v5e
topology: v5e:2x2
jax: 0.10.0
libtpu: 0.0.40
codegen_flags: <defaults>
</compile_context>

<pallas_src>
import functools

import jax
import jax.numpy as jnp
from jax.experimental import pallas as pl
from jax.experimental.pallas import tpu as pltpu

V_PAD = 128  # lane-pad target for the vocab projection / greedy argmax

_VMEM = pl.BlockSpec(memory_space=pltpu.MemorySpace.VMEM)
_SMEM = pl.BlockSpec(memory_space=pltpu.MemorySpace.SMEM)


# ----------------------------------------------------------------------------
# shared LSTM gate math (gate order i, f, g, o)
# ----------------------------------------------------------------------------

def _lstm_update(gates, h, c, H):
    i_g = jax.nn.sigmoid(gates[:, 0 * H:1 * H])
    f_g = jax.nn.sigmoid(gates[:, 1 * H:2 * H])
    g_g = jnp.tanh(gates[:, 2 * H:3 * H])
    o_g = jax.nn.sigmoid(gates[:, 3 * H:4 * H])
    c_new = f_g * c + i_g * g_g
    h_new = o_g * jnp.tanh(c_new)
    return h_new, c_new


# ----------------------------------------------------------------------------
# Pallas kernels
# ----------------------------------------------------------------------------

def encoder_kernel(emb_ref, wih_ref, whh_ref, b_ref,
                   states_ref, h_out_ref, c_out_ref):
    """Full LSTM over the source sequence in one kernel.

    emb_ref    : [L, B, E]   embedded source tokens
    wih_ref    : [E, 4H]     input->gates weights
    whh_ref    : [H, 4H]     hidden->gates weights
    b_ref      : [1, 4H]     folded bias (bih + bhh)
    states_ref : [L, B, H]   all hidden states (encoder_states)
    h_out/c_out: [B, H]      final hidden / cell state
    """
    L, B, _ = emb_ref.shape
    H = whh_ref.shape[0]

    wih = wih_ref[...]
    whh = whh_ref[...]
    b = b_ref[...]

    h = jnp.zeros((B, H), jnp.float32)
    c = jnp.zeros((B, H), jnp.float32)
    # L is static at trace time -> statically unrolled loop (LLO visibility).
    for t in range(L):
        x_t = emb_ref[t]                                        # [B, E]
        gates = (jnp.dot(x_t, wih, preferred_element_type=jnp.float32)
                 + jnp.dot(h, whh, preferred_element_type=jnp.float32)
                 + b)                                            # [B, 4H]
        h, c = _lstm_update(gates, h, c, H)
        states_ref[t] = h
    h_out_ref[...] = h
    c_out_ref[...] = c


def decoder_kernel(mask_ref, trg_emb_ref, enc_ref, h0_ref, c0_ref,
                   wihx_ref, wihc_ref, whh_ref, b_ref,
                   wfc_ref, bfc_ref, demb_ref,
                   out_ref, *, v_real):
    """Fused decode loop: all T steps of attention + LSTM cell + projection.

    mask_ref    : [T]        int32 SMEM teacher-forcing mask (1 = use trg[t])
    trg_emb_ref : [T, B, E]  pre-gathered target-token embeddings
    enc_ref     : [B, L, H]  encoder states (lane axis = H)
    h0/c0       : [B, H]     initial hidden / cell (from encoder)
    wihx_ref    : [E, 4H]    embedding -> gates
    wihc_ref    : [H, 4H]    context   -> gates
    whh_ref     : [H, 4H]    hidden    -> gates
    b_ref       : [1, 4H]    folded bias
    wfc_ref     : [H, Vp]    output projection (V padded to Vp lanes)
    bfc_ref     : [1, Vp]
    demb_ref    : [Vp, E]    decoder embedding table (padded rows = 0)
    out_ref     : [T, B, Vp] logits per step (row 0 is zeros, as in reference)
    """
    T, B, _ = trg_emb_ref.shape
    H = whh_ref.shape[0]
    Vp = wfc_ref.shape[1]

    # Loop-invariant loads, hoisted out of the time loop.
    enc = enc_ref[...]                                           # [B, L, H]
    b = b_ref[...]                                               # [1, 4H]
    bfc = bfc_ref[...]                                           # [1, Vp]
    lane = jax.lax.broadcasted_iota(jnp.int32, (B, Vp), 1)       # [B, Vp]

    out_ref[0] = jnp.zeros((B, Vp), jnp.float32)                 # outputs[0] = 0

    def step(t, carry):
        h, c, x_emb = carry

        # --- dot-product attention (reductions along lane axes) -----------
        scores = jnp.sum(enc * h[:, None, :], axis=-1)           # [B, L]
        scores = scores - jnp.max(scores, axis=-1, keepdims=True)
        w = jnp.exp(scores)
        w = w / jnp.sum(w, axis=-1, keepdims=True)               # exact softmax
        context = jnp.sum(w[:, :, None] * enc, axis=1)           # [B, H]

        # --- LSTM cell (split input matmuls, no in-kernel concat) ---------
        gates = (jnp.dot(x_emb, wihx_ref[...], preferred_element_type=jnp.float32)
                 + jnp.dot(context, wihc_ref[...], preferred_element_type=jnp.float32)
                 + jnp.dot(h, whh_ref[...], preferred_element_type=jnp.float32)
                 + b)                                            # [B, 4H]
        h_new, c_new = _lstm_update(gates, h, c, H)

        # --- lane-dense output projection ---------------------------------
        logits = (jnp.dot(h_new, wfc_ref[...], preferred_element_type=jnp.float32)
                  + bfc)                                         # [B, Vp]
        out_ref[t] = logits

        # --- next input token: teacher forcing vs greedy argmax ------------
        masked = jnp.where(lane < v_real, logits, -1e30)         # hide pad lanes
        mx = jnp.max(masked, axis=-1, keepdims=True)
        idx = jnp.min(jnp.where(masked >= mx, lane, Vp),
                      axis=-1, keepdims=True)                    # first argmax, [B,1]
        onehot = (lane == idx).astype(jnp.float32)               # [B, Vp]
        greedy_emb = jnp.dot(onehot, demb_ref[...],
                             preferred_element_type=jnp.float32) # [B, E]
        m = mask_ref[t].astype(jnp.float32)                      # scalar 0/1
        x_next = m * trg_emb_ref[t] + (1.0 - m) * greedy_emb
        return h_new, c_new, x_next

    carry0 = (h0_ref[...], c0_ref[...], trg_emb_ref[0])
    jax.lax.fori_loop(1, T, step, carry0)


# ----------------------------------------------------------------------------
# Wrappers (whole-array blocks; shapes are tiny so no tiling grid is needed)
# ----------------------------------------------------------------------------

def run_encoder(emb_src, enc_params):
    L, B, _ = emb_src.shape
    H = enc_params["whh"].shape[0]
    out_shape = (jax.ShapeDtypeStruct((L, B, H), jnp.float32),
                 jax.ShapeDtypeStruct((B, H), jnp.float32),
                 jax.ShapeDtypeStruct((B, H), jnp.float32))
    return pl.pallas_call(
        encoder_kernel,
        out_shape=out_shape,
        in_specs=[_VMEM] * 4,
        out_specs=(_VMEM, _VMEM, _VMEM),
    )(emb_src, enc_params["wih"], enc_params["whh"], enc_params["b"])


def run_decoder(tf_mask, trg_emb, enc_states, hidden, cell,
                dec_params, wfc_pad, bfc_pad, demb_pad):
    T, B, _ = trg_emb.shape
    Vp = wfc_pad.shape[1]
    V = dec_params["wfc"].shape[1]
    kernel = functools.partial(decoder_kernel, v_real=V)
    return pl.pallas_call(
        kernel,
        out_shape=jax.ShapeDtypeStruct((T, B, Vp), jnp.float32),
        in_specs=[_SMEM] + [_VMEM] * 11,
        out_specs=_VMEM,
    )(tf_mask, trg_emb, enc_states, hidden, cell,
      dec_params["wih_x"], dec_params["wih_c"], dec_params["whh"],
      dec_params["b"], wfc_pad, bfc_pad, demb_pad)


# ----------------------------------------------------------------------------
# Seq2Seq forward (mirrors the PyTorch loop; teacher forcing via jax PRNG)
# ----------------------------------------------------------------------------

def _pad_last(x, target):
    return jnp.pad(x, [(0, 0)] * (x.ndim - 1) + [(0, target - x.shape[-1])])


@jax.jit
def _seq2seq_impl(src, trg, tf_mask, params):
    enc_p, dec_p = params["enc"], params["dec"]
    V = dec_p["wfc"].shape[1]

    # encoder
    emb_src = jnp.take(enc_p["emb"], src, axis=0)                # [L, B, E]
    states_lbh, hidden, cell = run_encoder(emb_src, enc_p)
    enc_states = jnp.transpose(states_lbh, (1, 0, 2))            # [B, L, H]

    # pre-gather all target-token embeddings (teacher-forced path known ahead)
    trg_emb = jnp.take(dec_p["emb"], trg, axis=0)                # [T, B, E]

    # lane-pad the vocab projection + embedding table to V_PAD
    wfc_pad = _pad_last(dec_p["wfc"], V_PAD)                     # [H, Vp]
    bfc_pad = _pad_last(dec_p["bfc"], V_PAD)                     # [1, Vp]
    demb_pad = jnp.pad(dec_p["emb"],
                       ((0, V_PAD - dec_p["emb"].shape[0]), (0, 0)))  # [Vp, E]

    out_pad = run_decoder(tf_mask, trg_emb, enc_states, hidden, cell,
                          dec_p, wfc_pad, bfc_pad, demb_pad)     # [T, B, Vp]
    return out_pad[:, :, :V]                                     # [T, B, V]


def seq2seq_forward(src, trg, params, teacher_forcing_ratio=0.5, tf_key=None):
    """src: [src_len, batch] int32 ids; trg: [trg_len, batch] int32 ids."""
    if tf_key is None:
        # deterministic replacement for Python random.random() per step
        tf_key = jax.random.PRNGKey(1234)
    max_len = trg.shape[0]
    tf_draws = jax.random.uniform(tf_key, (max_len,))
    tf_mask = (tf_draws < teacher_forcing_ratio).astype(jnp.int32)
    return _seq2seq_impl(src, trg, tf_mask, params)


# ----------------------------------------------------------------------------
# Deterministic parameter construction
# ----------------------------------------------------------------------------

def make_params(src_vocab, trg_vocab, emb_dim, hidden, key):
    ks = jax.random.split(key, 11)
    s = 0.08
    enc = {
        "emb": s * jax.random.normal(ks[0], (src_vocab, emb_dim), jnp.float32),
        "wih": s * jax.random.normal(ks[1], (emb_dim, 4 * hidden), jnp.float32),
        "whh": s * jax.random.normal(ks[2], (hidden, 4 * hidden), jnp.float32),
        "b":   s * jax.random.normal(ks[3], (1, 4 * hidden), jnp.float32),
    }
    dec = {
        "emb":   s * jax.random.normal(ks[4], (trg_vocab, emb_dim), jnp.float32),
        "wih_x": s * jax.random.normal(ks[5], (emb_dim, 4 * hidden), jnp.float32),
        "wih_c": s * jax.random.normal(ks[6], (hidden, 4 * hidden), jnp.float32),
        "whh":   s * jax.random.normal(ks[7], (hidden, 4 * hidden), jnp.float32),
        "b":     s * jax.random.normal(ks[8], (1, 4 * hidden), jnp.float32),
        "wfc":   s * jax.random.normal(ks[9], (hidden, trg_vocab), jnp.float32),
        "bfc":   s * jax.random.normal(ks[10], (1, trg_vocab), jnp.float32),
    }
    return {"enc": enc, "dec": dec}


if __name__ == "__main__":
    key = jax.random.PRNGKey(0)
    k_src, k_trg, k_par, k_tf = jax.random.split(key, 4)

    SRC_LEN, TRG_LEN, BATCH = 8, 8, 2
    EMB, HID = 16, 32
    SRC_VOCAB, TRG_VOCAB = 20, 24

    src = jax.random.randint(k_src, (SRC_LEN, BATCH), 0, SRC_VOCAB, jnp.int32)
    trg = jax.random.randint(k_trg, (TRG_LEN, BATCH), 0, TRG_VOCAB, jnp.int32)
    params = make_params(SRC_VOCAB, TRG_VOCAB, EMB, HID, k_par)

    outputs = seq2seq_forward(src, trg, params,
                              teacher_forcing_ratio=0.5, tf_key=k_tf)
    outputs = jax.block_until_ready(outputs)

    assert outputs.shape == (TRG_LEN, BATCH, TRG_VOCAB)
    assert bool(jnp.all(jnp.isfinite(outputs)))
    print("KERNEL_OK")
</pallas_src>

<mosaic_0001>
module attributes {stable_mosaic.version = 11 : i64} {
  func.func @decoder_kernel(%arg0: memref<8xi32, #tpu.memory_space<smem>>, %arg1: memref<8x2x16xf32, #tpu.memory_space<vmem>>, %arg2: memref<2x8x32xf32, #tpu.memory_space<vmem>>, %arg3: memref<2x32xf32, #tpu.memory_space<vmem>>, %arg4: memref<2x32xf32, #tpu.memory_space<vmem>>, %arg5: memref<16x128xf32, #tpu.memory_space<vmem>>, %arg6: memref<32x128xf32, #tpu.memory_space<vmem>>, %arg7: memref<32x128xf32, #tpu.memory_space<vmem>>, %arg8: memref<1x128xf32, #tpu.memory_space<vmem>>, %arg9: memref<32x128xf32, #tpu.memory_space<vmem>>, %arg10: memref<1x128xf32, #tpu.memory_space<vmem>>, %arg11: memref<128x16xf32, #tpu.memory_space<vmem>>, %arg12: memref<8x2x128xf32, #tpu.memory_space<vmem>>) attributes {dimension_semantics = [], scalar_prefetch = 0 : i64, scratch_operands = 0 : i64, tpu.core_type = #tpu.core_type<tc>} {
    %c0 = arith.constant 0 : index
    %c0_0 = arith.constant 0 : index
    %c0_1 = arith.constant 0 : index
    %0 = vector.load %arg2[%c0, %c0_0, %c0_1] : memref<2x8x32xf32, #tpu.memory_space<vmem>>, vector<2x8x32xf32>
    %c0_2 = arith.constant 0 : index
    %c0_3 = arith.constant 0 : index
    %1 = vector.load %arg8[%c0_2, %c0_3] : memref<1x128xf32, #tpu.memory_space<vmem>>, vector<1x128xf32>
    %c0_4 = arith.constant 0 : index
    %c0_5 = arith.constant 0 : index
    %2 = vector.load %arg10[%c0_4, %c0_5] : memref<1x128xf32, #tpu.memory_space<vmem>>, vector<1x128xf32>
    %3 = tpu.iota {dimensions = array<i32: 1>} : vector<2x128xi32>
    %cst = arith.constant 0.000000e+00 : f32
    %4 = vector.broadcast %cst : f32 to vector<2x128xf32>
    %c0_6 = arith.constant 0 : index
    %c0_7 = arith.constant 0 : index
    %c0_8 = arith.constant 0 : index
    %5 = vector.load %arg12[%c0_6, %c0_7, %c0_8] : memref<8x2x128xf32, #tpu.memory_space<vmem>>, vector<1x2x128xf32>
    %6 = vector.shape_cast %5 : vector<1x2x128xf32> to vector<2x128xf32>
    %7 = vector.shape_cast %4 : vector<2x128xf32> to vector<1x2x128xf32>
    tpu.vector_store %arg12[%c0_6, %c0_7, %c0_8], %7 {strides = array<i32>} : memref<8x2x128xf32, #tpu.memory_space<vmem>>, vector<1x2x128xf32>,
    %c0_9 = arith.constant 0 : index
    %c0_10 = arith.constant 0 : index
    %8 = vector.load %arg3[%c0_9, %c0_10] : memref<2x32xf32, #tpu.memory_space<vmem>>, vector<2x32xf32>
    %c0_11 = arith.constant 0 : index
    %c0_12 = arith.constant 0 : index
    %9 = vector.load %arg4[%c0_11, %c0_12] : memref<2x32xf32, #tpu.memory_space<vmem>>, vector<2x32xf32>
    %c0_13 = arith.constant 0 : index
    %c0_14 = arith.constant 0 : index
    %c0_15 = arith.constant 0 : index
    %10 = vector.load %arg1[%c0_13, %c0_14, %c0_15] : memref<8x2x16xf32, #tpu.memory_space<vmem>>, vector<1x2x16xf32>
    %11 = vector.shape_cast %10 : vector<1x2x16xf32> to vector<2x16xf32>
    %c1_i32 = arith.constant 1 : i32
    %c7_i32 = arith.constant 7 : i32
    %12 = arith.addi %c1_i32, %c7_i32 : i32
    %c1_i32_16 = arith.constant 1 : i32
    %13:3 = scf.for %arg13 = %c1_i32 to %12 step %c1_i32_16 iter_args(%arg14 = %8, %arg15 = %9, %arg16 = %11) -> (vector<2x32xf32>, vector<2x32xf32>, vector<2x16xf32>)  : i32 {
      %14 = vector.shape_cast %arg14 : vector<2x32xf32> to vector<2x1x32xf32>
      %15 = vector.broadcast %14 : vector<2x1x32xf32> to vector<2x8x32xf32>
      %16 = arith.mulf %0, %15 : vector<2x8x32xf32>
      %cst_18 = arith.constant dense<0.000000e+00> : vector<2x8xf32>
      %17 = vector.multi_reduction <add>, %16, %cst_18 [2] : vector<2x8x32xf32> to vector<2x8xf32>
      %cst_19 = arith.constant dense<0xFF800000> : vector<2xf32>
      %18 = vector.multi_reduction <maximumf>, %17, %cst_19 [1] : vector<2x8xf32> to vector<2xf32>
      %19 = vector.shape_cast %18 : vector<2xf32> to vector<2x1xf32>
      %20 = vector.broadcast %19 : vector<2x1xf32> to vector<2x8xf32>
      %21 = arith.subf %17, %20 : vector<2x8xf32>
      %22 = math.exp %21 : vector<2x8xf32>
      %cst_20 = arith.constant dense<0.000000e+00> : vector<2xf32>
      %23 = vector.multi_reduction <add>, %22, %cst_20 [1] : vector<2x8xf32> to vector<2xf32>
      %24 = vector.shape_cast %23 : vector<2xf32> to vector<2x1xf32>
      %25 = vector.broadcast %24 : vector<2x1xf32> to vector<2x8xf32>
      %26 = arith.divf %22, %25 : vector<2x8xf32>
      %27 = vector.shape_cast %26 : vector<2x8xf32> to vector<2x8x1xf32>
      %28 = vector.broadcast %27 : vector<2x8x1xf32> to vector<2x8x32xf32>
      %29 = arith.mulf %28, %0 : vector<2x8x32xf32>
      %cst_21 = arith.constant dense<0.000000e+00> : vector<2x32xf32>
      %30 = vector.multi_reduction <add>, %29, %cst_21 [1] : vector<2x8x32xf32> to vector<2x32xf32>
      %c0_22 = arith.constant 0 : index
      %c0_23 = arith.constant 0 : index
      %31 = vector.load %arg5[%c0_22, %c0_23] : memref<16x128xf32, #tpu.memory_space<vmem>>, vector<16x128xf32>
      %cst_24 = arith.constant dense<0.000000e+00> : vector<2x128xf32>
      %32 = tpu.matmul %arg16, %31, %cst_24 {dimension_numbers = #tpu.dot_dimension_numbers<[1], [0], [0], [1], [0, 0, 1, 1], [], []>} : vector<2x16xf32>, vector<16x128xf32>, vector<2x128xf32> -> vector<2x128xf32>
      %c0_25 = arith.constant 0 : index
      %c0_26 = arith.constant 0 : index
      %33 = vector.load %arg6[%c0_25, %c0_26] : memref<32x128xf32, #tpu.memory_space<vmem>>, vector<32x128xf32>
      %cst_27 = arith.constant dense<0.000000e+00> : vector<2x128xf32>
      %34 = tpu.matmul %30, %33, %cst_27 {dimension_numbers = #tpu.dot_dimension_numbers<[1], [0], [0], [1], [0, 0, 1, 1], [], []>} : vector<2x32xf32>, vector<32x128xf32>, vector<2x128xf32> -> vector<2x128xf32>
      %35 = arith.addf %32, %34 : vector<2x128xf32>
      %c0_28 = arith.constant 0 : index
      %c0_29 = arith.constant 0 : index
      %36 = vector.load %arg7[%c0_28, %c0_29] : memref<32x128xf32, #tpu.memory_space<vmem>>, vector<32x128xf32>
      %cst_30 = arith.constant dense<0.000000e+00> : vector<2x128xf32>
      %37 = tpu.matmul %arg14, %36, %cst_30 {dimension_numbers = #tpu.dot_dimension_numbers<[1], [0], [0], [1], [0, 0, 1, 1], [], []>} : vector<2x32xf32>, vector<32x128xf32>, vector<2x128xf32> -> vector<2x128xf32>
      %38 = arith.addf %35, %37 : vector<2x128xf32>
      %39 = vector.broadcast %1 : vector<1x128xf32> to vector<2x128xf32>
      %40 = arith.addf %38, %39 : vector<2x128xf32>
      %41 = vector.extract_strided_slice %40 {offsets = [0, 0], sizes = [2, 32], strides = [1, 1]} : vector<2x128xf32> to vector<2x32xf32>
      %42 = arith.negf %41 : vector<2x32xf32>
      %43 = math.exp %42 : vector<2x32xf32>
      %cst_31 = arith.constant 1.000000e+00 : f32
      %44 = vector.broadcast %cst_31 : f32 to vector<2x32xf32>
      %45 = arith.addf %44, %43 : vector<2x32xf32>
      %46 = arith.divf %44, %45 : vector<2x32xf32>
      %47 = vector.extract_strided_slice %40 {offsets = [0, 32], sizes = [2, 32], strides = [1, 1]} : vector<2x128xf32> to vector<2x32xf32>
      %48 = arith.negf %47 : vector<2x32xf32>
      %49 = math.exp %48 : vector<2x32xf32>
      %cst_32 = arith.constant 1.000000e+00 : f32
      %50 = vector.broadcast %cst_32 : f32 to vector<2x32xf32>
      %51 = arith.addf %50, %49 : vector<2x32xf32>
      %52 = arith.divf %50, %51 : vector<2x32xf32>
      %53 = vector.extract_strided_slice %40 {offsets = [0, 64], sizes = [2, 32], strides = [1, 1]} : vector<2x128xf32> to vector<2x32xf32>
      %54 = math.tanh %53 : vector<2x32xf32>
      %55 = vector.extract_strided_slice %40 {offsets = [0, 96], sizes = [2, 32], strides = [1, 1]} : vector<2x128xf32> to vector<2x32xf32>
      %56 = arith.negf %55 : vector<2x32xf32>
      %57 = math.exp %56 : vector<2x32xf32>
      %cst_33 = arith.constant 1.000000e+00 : f32
      %58 = vector.broadcast %cst_33 : f32 to vector<2x32xf32>
      %59 = arith.addf %58, %57 : vector<2x32xf32>
      %60 = arith.divf %58, %59 : vector<2x32xf32>
      %61 = arith.mulf %52, %arg15 : vector<2x32xf32>
      %62 = arith.mulf %46, %54 : vector<2x32xf32>
      %63 = arith.addf %61, %62 : vector<2x32xf32>
      %64 = math.tanh %63 : vector<2x32xf32>
      %65 = arith.mulf %60, %64 : vector<2x32xf32>
      %c0_34 = arith.constant 0 : index
      %c0_35 = arith.constant 0 : index
      %66 = vector.load %arg9[%c0_34, %c0_35] : memref<32x128xf32, #tpu.memory_space<vmem>>, vector<32x128xf32>
      %cst_36 = arith.constant dense<0.000000e+00> : vector<2x128xf32>
      %67 = tpu.matmul %65, %66, %cst_36 {dimension_numbers = #tpu.dot_dimension_numbers<[1], [0], [0], [1], [0, 0, 1, 1], [], []>} : vector<2x32xf32>, vector<32x128xf32>, vector<2x128xf32> -> vector<2x128xf32>
      %68 = vector.broadcast %2 : vector<1x128xf32> to vector<2x128xf32>
      %69 = arith.addf %67, %68 : vector<2x128xf32>
      %70 = arith.index_cast %arg13 : i32 to index
      %c0_37 = arith.constant 0 : index
      %c0_38 = arith.constant 0 : index
      %71 = vector.load %arg12[%70, %c0_37, %c0_38] : memref<8x2x128xf32, #tpu.memory_space<vmem>>, vector<1x2x128xf32>
      %72 = vector.shape_cast %71 : vector<1x2x128xf32> to vector<2x128xf32>
      %73 = vector.shape_cast %69 : vector<2x128xf32> to vector<1x2x128xf32>
      tpu.vector_store %arg12[%70, %c0_37, %c0_38], %73 {strides = array<i32>} : memref<8x2x128xf32, #tpu.memory_space<vmem>>, vector<1x2x128xf32>,
      %c24_i32 = arith.constant 24 : i32
      %74 = vector.broadcast %c24_i32 : i32 to vector<2x128xi32>
      %75 = arith.cmpi slt, %3, %74 : vector<2x128xi32>
      %cst_39 = arith.constant -1.000000e+30 : f32
      %76 = vector.broadcast %cst_39 : f32 to vector<2x128xf32>
      %77 = arith.select %75, %69, %76 : vector<2x128xi1>, vector<2x128xf32>
      %cst_40 = arith.constant dense<0xFF800000> : vector<2xf32>
      %78 = vector.multi_reduction <maximumf>, %77, %cst_40 [1] : vector<2x128xf32> to vector<2xf32>
      %79 = vector.shape_cast %78 : vector<2xf32> to vector<2x1xf32>
      %80 = vector.broadcast %79 : vector<2x1xf32> to vector<2x128xf32>
      %81 = arith.cmpf oge, %77, %80 : vector<2x128xf32>
      %c128_i32 = arith.constant 128 : i32
      %82 = vector.broadcast %c128_i32 : i32 to vector<2x128xi32>
      %83 = arith.select %81, %3, %82 : vector<2x128xi1>, vector<2x128xi32>
      %cst_41 = arith.constant dense<2147483647> : vector<2xi32>
      %84 = vector.multi_reduction <minsi>, %83, %cst_41 [1] : vector<2x128xi32> to vector<2xi32>
      %85 = vector.shape_cast %84 : vector<2xi32> to vector<2x1xi32>
      %86 = vector.broadcast %85 : vector<2x1xi32> to vector<2x128xi32>
      %87 = arith.cmpi eq, %3, %86 : vector<2x128xi32>
      %88 = arith.extui %87 : vector<2x128xi1> to vector<2x128xi32>
      %89 = arith.sitofp %88 : vector<2x128xi32> to vector<2x128xf32>
      %c0_42 = arith.constant 0 : index
      %c0_43 = arith.constant 0 : index
      %90 = vector.load %arg11[%c0_42, %c0_43] : memref<128x16xf32, #tpu.memory_space<vmem>>, vector<128x16xf32>
      %cst_44 = arith.constant dense<0.000000e+00> : vector<2x16xf32>
      %91 = tpu.matmul %89, %90, %cst_44 {dimension_numbers = #tpu.dot_dimension_numbers<[1], [0], [0], [1], [0, 0, 1, 1], [], []>} : vector<2x128xf32>, vector<128x16xf32>, vector<2x16xf32> -> vector<2x16xf32>
      %92 = arith.index_cast %arg13 : i32 to index
      %93 = memref.load %arg0[%92] : memref<8xi32, #tpu.memory_space<smem>>
      %94 = arith.sitofp %93 : i32 to f32
      %95 = arith.index_cast %arg13 : i32 to index
      %c0_45 = arith.constant 0 : index
      %c0_46 = arith.constant 0 : index
      %96 = vector.load %arg1[%95, %c0_45, %c0_46] : memref<8x2x16xf32, #tpu.memory_space<vmem>>, vector<1x2x16xf32>
      %97 = vector.shape_cast %96 : vector<1x2x16xf32> to vector<2x16xf32>
      %98 = vector.broadcast %94 : f32 to vector<2x16xf32>
      %99 = arith.mulf %98, %97 : vector<2x16xf32>
      %cst_47 = arith.constant 1.000000e+00 : f32
      %100 = arith.subf %cst_47, %94 : f32
      %101 = vector.broadcast %100 : f32 to vector<2x16xf32>
      %102 = arith.mulf %101, %91 : vector<2x16xf32>
      %103 = arith.addf %99, %102 : vector<2x16xf32>
      scf.yield %65, %63, %103 : vector<2x32xf32>, vector<2x32xf32>, vector<2x16xf32>
    }
    %c7_i32_17 = arith.constant 7 : i32
    return
  }
}

module attributes {stable_mosaic.version = 11 : i64} {
  func.func @encoder_kernel(%arg0: memref<8x2x16xf32, #tpu.memory_space<vmem>>, %arg1: memref<16x128xf32, #tpu.memory_space<vmem>>, %arg2: memref<32x128xf32, #tpu.memory_space<vmem>>, %arg3: memref<1x128xf32, #tpu.memory_space<vmem>>, %arg4: memref<8x2x32xf32, #tpu.memory_space<vmem>>, %arg5: memref<2x32xf32, #tpu.memory_space<vmem>>, %arg6: memref<2x32xf32, #tpu.memory_space<vmem>>) attributes {dimension_semantics = [], scalar_prefetch = 0 : i64, scratch_operands = 0 : i64, tpu.core_type = #tpu.core_type<tc>} {
    %c0 = arith.constant 0 : index
    %c0_0 = arith.constant 0 : index
    %0 = vector.load %arg1[%c0, %c0_0] : memref<16x128xf32, #tpu.memory_space<vmem>>, vector<16x128xf32>
    %c0_1 = arith.constant 0 : index
    %c0_2 = arith.constant 0 : index
    %1 = vector.load %arg2[%c0_1, %c0_2] : memref<32x128xf32, #tpu.memory_space<vmem>>, vector<32x128xf32>
    %c0_3 = arith.constant 0 : index
    %c0_4 = arith.constant 0 : index
    %2 = vector.load %arg3[%c0_3, %c0_4] : memref<1x128xf32, #tpu.memory_space<vmem>>, vector<1x128xf32>
    %cst = arith.constant 0.000000e+00 : f32
    %3 = vector.broadcast %cst : f32 to vector<2x32xf32>
    %cst_5 = arith.constant 0.000000e+00 : f32
    %4 = vector.broadcast %cst_5 : f32 to vector<2x32xf32>
    %c0_6 = arith.constant 0 : index
    %c0_7 = arith.constant 0 : index
    %c0_8 = arith.constant 0 : index
    %5 = vector.load %arg0[%c0_6, %c0_7, %c0_8] : memref<8x2x16xf32, #tpu.memory_space<vmem>>, vector<1x2x16xf32>
    %6 = vector.shape_cast %5 : vector<1x2x16xf32> to vector<2x16xf32>
    %cst_9 = arith.constant dense<0.000000e+00> : vector<2x128xf32>
    %7 = tpu.matmul %6, %0, %cst_9 {dimension_numbers = #tpu.dot_dimension_numbers<[1], [0], [0], [1], [0, 0, 1, 1], [], []>} : vector<2x16xf32>, vector<16x128xf32>, vector<2x128xf32> -> vector<2x128xf32>
    %cst_10 = arith.constant dense<0.000000e+00> : vector<2x128xf32>
    %8 = tpu.matmul %3, %1, %cst_10 {dimension_numbers = #tpu.dot_dimension_numbers<[1], [0], [0], [1], [0, 0, 1, 1], [], []>} : vector<2x32xf32>, vector<32x128xf32>, vector<2x128xf32> -> vector<2x128xf32>
    %9 = arith.addf %7, %8 : vector<2x128xf32>
    %10 = vector.broadcast %2 : vector<1x128xf32> to vector<2x128xf32>
    %11 = arith.addf %9, %10 : vector<2x128xf32>
    %12 = vector.extract_strided_slice %11 {offsets = [0, 0], sizes = [2, 32], strides = [1, 1]} : vector<2x128xf32> to vector<2x32xf32>
    %13 = arith.negf %12 : vector<2x32xf32>
    %14 = math.exp %13 : vector<2x32xf32>
    %cst_11 = arith.constant 1.000000e+00 : f32
    %15 = vector.broadcast %cst_11 : f32 to vector<2x32xf32>
    %16 = arith.addf %15, %14 : vector<2x32xf32>
    %17 = arith.divf %15, %16 : vector<2x32xf32>
    %18 = vector.extract_strided_slice %11 {offsets = [0, 32], sizes = [2, 32], strides = [1, 1]} : vector<2x128xf32> to vector<2x32xf32>
    %19 = arith.negf %18 : vector<2x32xf32>
    %20 = math.exp %19 : vector<2x32xf32>
    %cst_12 = arith.constant 1.000000e+00 : f32
    %21 = vector.broadcast %cst_12 : f32 to vector<2x32xf32>
    %22 = arith.addf %21, %20 : vector<2x32xf32>
    %23 = arith.divf %21, %22 : vector<2x32xf32>
    %24 = vector.extract_strided_slice %11 {offsets = [0, 64], sizes = [2, 32], strides = [1, 1]} : vector<2x128xf32> to vector<2x32xf32>
    %25 = math.tanh %24 : vector<2x32xf32>
    %26 = vector.extract_strided_slice %11 {offsets = [0, 96], sizes = [2, 32], strides = [1, 1]} : vector<2x128xf32> to vector<2x32xf32>
    %27 = arith.negf %26 : vector<2x32xf32>
    %28 = math.exp %27 : vector<2x32xf32>
    %cst_13 = arith.constant 1.000000e+00 : f32
    %29 = vector.broadcast %cst_13 : f32 to vector<2x32xf32>
    %30 = arith.addf %29, %28 : vector<2x32xf32>
    %31 = arith.divf %29, %30 : vector<2x32xf32>
    %32 = arith.mulf %23, %4 : vector<2x32xf32>
    %33 = arith.mulf %17, %25 : vector<2x32xf32>
    %34 = arith.addf %32, %33 : vector<2x32xf32>
    %35 = math.tanh %34 : vector<2x32xf32>
    %36 = arith.mulf %31, %35 : vector<2x32xf32>
    %c0_14 = arith.constant 0 : index
    %c0_15 = arith.constant 0 : index
    %c0_16 = arith.constant 0 : index
    %37 = vector.load %arg4[%c0_14, %c0_15, %c0_16] : memref<8x2x32xf32, #tpu.memory_space<vmem>>, vector<1x2x32xf32>
    %38 = vector.shape_cast %37 : vector<1x2x32xf32> to vector<2x32xf32>
    %39 = vector.shape_cast %36 : vector<2x32xf32> to vector<1x2x32xf32>
    tpu.vector_store %arg4[%c0_14, %c0_15, %c0_16], %39 {strides = array<i32>} : memref<8x2x32xf32, #tpu.memory_space<vmem>>, vector<1x2x32xf32>,
    %c1 = arith.constant 1 : index
    %c0_17 = arith.constant 0 : index
    %c0_18 = arith.constant 0 : index
    %40 = vector.load %arg0[%c1, %c0_17, %c0_18] : memref<8x2x16xf32, #tpu.memory_space<vmem>>, vector<1x2x16xf32>
    %41 = vector.shape_cast %40 : vector<1x2x16xf32> to vector<2x16xf32>
    %cst_19 = arith.constant dense<0.000000e+00> : vector<2x128xf32>
    %42 = tpu.matmul %41, %0, %cst_19 {dimension_numbers = #tpu.dot_dimension_numbers<[1], [0], [0], [1], [0, 0, 1, 1], [], []>} : vector<2x16xf32>, vector<16x128xf32>, vector<2x128xf32> -> vector<2x128xf32>
    %cst_20 = arith.constant dense<0.000000e+00> : vector<2x128xf32>
    %43 = tpu.matmul %36, %1, %cst_20 {dimension_numbers = #tpu.dot_dimension_numbers<[1], [0], [0], [1], [0, 0, 1, 1], [], []>} : vector<2x32xf32>, vector<32x128xf32>, vector<2x128xf32> -> vector<2x128xf32>
    %44 = arith.addf %42, %43 : vector<2x128xf32>
    %45 = vector.broadcast %2 : vector<1x128xf32> to vector<2x128xf32>
    %46 = arith.addf %44, %45 : vector<2x128xf32>
    %47 = vector.extract_strided_slice %46 {offsets = [0, 0], sizes = [2, 32], strides = [1, 1]} : vector<2x128xf32> to vector<2x32xf32>
    %48 = arith.negf %47 : vector<2x32xf32>
    %49 = math.exp %48 : vector<2x32xf32>
    %cst_21 = arith.constant 1.000000e+00 : f32
    %50 = vector.broadcast %cst_21 : f32 to vector<2x32xf32>
    %51 = arith.addf %50, %49 : vector<2x32xf32>
    %52 = arith.divf %50, %51 : vector<2x32xf32>
    %53 = vector.extract_strided_slice %46 {offsets = [0, 32], sizes = [2, 32], strides = [1, 1]} : vector<2x128xf32> to vector<2x32xf32>
    %54 = arith.negf %53 : vector<2x32xf32>
    %55 = math.exp %54 : vector<2x32xf32>
    %cst_22 = arith.constant 1.000000e+00 : f32
    %56 = vector.broadcast %cst_22 : f32 to vector<2x32xf32>
    %57 = arith.addf %56, %55 : vector<2x32xf32>
    %58 = arith.divf %56, %57 : vector<2x32xf32>
    %59 = vector.extract_strided_slice %46 {offsets = [0, 64], sizes = [2, 32], strides = [1, 1]} : vector<2x128xf32> to vector<2x32xf32>
    %60 = math.tanh %59 : vector<2x32xf32>
    %61 = vector.extract_strided_slice %46 {offsets = [0, 96], sizes = [2, 32], strides = [1, 1]} : vector<2x128xf32> to vector<2x32xf32>
    %62 = arith.negf %61 : vector<2x32xf32>
    %63 = math.exp %62 : vector<2x32xf32>
    %cst_23 = arith.constant 1.000000e+00 : f32
    %64 = vector.broadcast %cst_23 : f32 to vector<2x32xf32>
    %65 = arith.addf %64, %63 : vector<2x32xf32>
    %66 = arith.divf %64, %65 : vector<2x32xf32>
    %67 = arith.mulf %58, %34 : vector<2x32xf32>
    %68 = arith.mulf %52, %60 : vector<2x32xf32>
    %69 = arith.addf %67, %68 : vector<2x32xf32>
    %70 = math.tanh %69 : vector<2x32xf32>
    %71 = arith.mulf %66, %70 : vector<2x32xf32>
    %c1_24 = arith.constant 1 : index
    %c0_25 = arith.constant 0 : index
    %c0_26 = arith.constant 0 : index
    %72 = vector.load %arg4[%c1_24, %c0_25, %c0_26] : memref<8x2x32xf32, #tpu.memory_space<vmem>>, vector<1x2x32xf32>
    %73 = vector.shape_cast %72 : vector<1x2x32xf32> to vector<2x32xf32>
    %74 = vector.shape_cast %71 : vector<2x32xf32> to vector<1x2x32xf32>
    tpu.vector_store %arg4[%c1_24, %c0_25, %c0_26], %74 {strides = array<i32>} : memref<8x2x32xf32, #tpu.memory_space<vmem>>, vector<1x2x32xf32>,
    %c2 = arith.constant 2 : index
    %c0_27 = arith.constant 0 : index
    %c0_28 = arith.constant 0 : index
    %75 = vector.load %arg0[%c2, %c0_27, %c0_28] : memref<8x2x16xf32, #tpu.memory_space<vmem>>, vector<1x2x16xf32>
    %76 = vector.shape_cast %75 : vector<1x2x16xf32> to vector<2x16xf32>
    %cst_29 = arith.constant dense<0.000000e+00> : vector<2x128xf32>
    %77 = tpu.matmul %76, %0, %cst_29 {dimension_numbers = #tpu.dot_dimension_numbers<[1], [0], [0], [1], [0, 0, 1, 1], [], []>} : vector<2x16xf32>, vector<16x128xf32>, vector<2x128xf32> -> vector<2x128xf32>
    %cst_30 = arith.constant dense<0.000000e+00> : vector<2x128xf32>
    %78 = tpu.matmul %71, %1, %cst_30 {dimension_numbers = #tpu.dot_dimension_numbers<[1], [0], [0], [1], [0, 0, 1, 1], [], []>} : vector<2x32xf32>, vector<32x128xf32>, vector<2x128xf32> -> vector<2x128xf32>
    %79 = arith.addf %77, %78 : vector<2x128xf32>
    %80 = vector.broadcast %2 : vector<1x128xf32> to vector<2x128xf32>
    %81 = arith.addf %79, %80 : vector<2x128xf32>
    %82 = vector.extract_strided_slice %81 {offsets = [0, 0], sizes = [2, 32], strides = [1, 1]} : vector<2x128xf32> to vector<2x32xf32>
    %83 = arith.negf %82 : vector<2x32xf32>
    %84 = math.exp %83 : vector<2x32xf32>
    %cst_31 = arith.constant 1.000000e+00 : f32
    %85 = vector.broadcast %cst_31 : f32 to vector<2x32xf32>
    %86 = arith.addf %85, %84 : vector<2x32xf32>
    %87 = arith.divf %85, %86 : vector<2x32xf32>
    %88 = vector.extract_strided_slice %81 {offsets = [0, 32], sizes = [2, 32], strides = [1, 1]} : vector<2x128xf32> to vector<2x32xf32>
    %89 = arith.negf %88 : vector<2x32xf32>
    %90 = math.exp %89 : vector<2x32xf32>
    %cst_32 = arith.constant 1.000000e+00 : f32
    %91 = vector.broadcast %cst_32 : f32 to vector<2x32xf32>
    %92 = arith.addf %91, %90 : vector<2x32xf32>
    %93 = arith.divf %91, %92 : vector<2x32xf32>
    %94 = vector.extract_strided_slice %81 {offsets = [0, 64], sizes = [2, 32], strides = [1, 1]} : vector<2x128xf32> to vector<2x32xf32>
    %95 = math.tanh %94 : vector<2x32xf32>
    %96 = vector.extract_strided_slice %81 {offsets = [0, 96], sizes = [2, 32], strides = [1, 1]} : vector<2x128xf32> to vector<2x32xf32>
    %97 = arith.negf %96 : vector<2x32xf32>
    %98 = math.exp %97 : vector<2x32xf32>
    %cst_33 = arith.constant 1.000000e+00 : f32
    %99 = vector.broadcast %cst_33 : f32 to vector<2x32xf32>
    %100 = arith.addf %99, %98 : vector<2x32xf32>
    %101 = arith.divf %99, %100 : vector<2x32xf32>
    %102 = arith.mulf %93, %69 : vector<2x32xf32>
    %103 = arith.mulf %87, %95 : vector<2x32xf32>
    %104 = arith.addf %102, %103 : vector<2x32xf32>
    %105 = math.tanh %104 : vector<2x32xf32>
    %106 = arith.mulf %101, %105 : vector<2x32xf32>
    %c2_34 = arith.constant 2 : index
    %c0_35 = arith.constant 0 : index
    %c0_36 = arith.constant 0 : index
    %107 = vector.load %arg4[%c2_34, %c0_35, %c0_36] : memref<8x2x32xf32, #tpu.memory_space<vmem>>, vector<1x2x32xf32>
    %108 = vector.shape_cast %107 : vector<1x2x32xf32> to vector<2x32xf32>
    %109 = vector.shape_cast %106 : vector<2x32xf32> to vector<1x2x32xf32>
    tpu.vector_store %arg4[%c2_34, %c0_35, %c0_36], %109 {strides = array<i32>} : memref<8x2x32xf32, #tpu.memory_space<vmem>>, vector<1x2x32xf32>,
    %c3 = arith.constant 3 : index
    %c0_37 = arith.constant 0 : index
    %c0_38 = arith.constant 0 : index
    %110 = vector.load %arg0[%c3, %c0_37, %c0_38] : memref<8x2x16xf32, #tpu.memory_space<vmem>>, vector<1x2x16xf32>
    %111 = vector.shape_cast %110 : vector<1x2x16xf32> to vector<2x16xf32>
    %cst_39 = arith.constant dense<0.000000e+00> : vector<2x128xf32>
    %112 = tpu.matmul %111, %0, %cst_39 {dimension_numbers = #tpu.dot_dimension_numbers<[1], [0], [0], [1], [0, 0, 1, 1], [], []>} : vector<2x16xf32>, vector<16x128xf32>, vector<2x128xf32> -> vector<2x128xf32>
    %cst_40 = arith.constant dense<0.000000e+00> : vector<2x128xf32>
    %113 = tpu.matmul %106, %1, %cst_40 {dimension_numbers = #tpu.dot_dimension_numbers<[1], [0], [0], [1], [0, 0, 1, 1], [], []>} : vector<2x32xf32>, vector<32x128xf32>, vector<2x128xf32> -> vector<2x128xf32>
    %114 = arith.addf %112, %113 : vector<2x128xf32>
    %115 = vector.broadcast %2 : vector<1x128xf32> to vector<2x128xf32>
    %116 = arith.addf %114, %115 : vector<2x128xf32>
    %117 = vector.extract_strided_slice %116 {offsets = [0, 0], sizes = [2, 32], strides = [1, 1]} : vector<2x128xf32> to vector<2x32xf32>
    %118 = arith.negf %117 : vector<2x32xf32>
    %119 = math.exp %118 : vector<2x32xf32>
    %cst_41 = arith.constant 1.000000e+00 : f32
    %120 = vector.broadcast %cst_41 : f32 to vector<2x32xf32>
    %121 = arith.addf %120, %119 : vector<2x32xf32>
    %122 = arith.divf %120, %121 : vector<2x32xf32>
    %123 = vector.extract_strided_slice %116 {offsets = [0, 32], sizes = [2, 32], strides = [1, 1]} : vector<2x128xf32> to vector<2x32xf32>
    %124 = arith.negf %123 : vector<2x32xf32>
    %125 = math.exp %124 : vector<2x32xf32>
    %cst_42 = arith.constant 1.000000e+00 : f32
    %126 = vector.broadcast %cst_42 : f32 to vector<2x32xf32>
    %127 = arith.addf %126, %125 : vector<2x32xf32>
    %128 = arith.divf %126, %127 : vector<2x32xf32>
    %129 = vector.extract_strided_slice %116 {offsets = [0, 64], sizes = [2, 32], strides = [1, 1]} : vector<2x128xf32> to vector<2x32xf32>
    %130 = math.tanh %129 : vector<2x32xf32>
    %131 = vector.extract_strided_slice %116 {offsets = [0, 96], sizes = [2, 32], strides = [1, 1]} : vector<2x128xf32> to vector<2x32xf32>
    %132 = arith.negf %131 : vector<2x32xf32>
    %133 = math.exp %132 : vector<2x32xf32>
    %cst_43 = arith.constant 1.000000e+00 : f32
    %134 = vector.broadcast %cst_43 : f32 to vector<2x32xf32>
    %135 = arith.addf %134, %133 : vector<2x32xf32>
    %136 = arith.divf %134, %135 : vector<2x32xf32>
    %137 = arith.mulf %128, %104 : vector<2x32xf32>
    %138 = arith.mulf %122, %130 : vector<2x32xf32>
    %139 = arith.addf %137, %138 : vector<2x32xf32>
    %140 = math.tanh %139 : vector<2x32xf32>
    %141 = arith.mulf %136, %140 : vector<2x32xf32>
    %c3_44 = arith.constant 3 : index
    %c0_45 = arith.constant 0 : index
    %c0_46 = arith.constant 0 : index
    %142 = vector.load %arg4[%c3_44, %c0_45, %c0_46] : memref<8x2x32xf32, #tpu.memory_space<vmem>>, vector<1x2x32xf32>
    %143 = vector.shape_cast %142 : vector<1x2x32xf32> to vector<2x32xf32>
    %144 = vector.shape_cast %141 : vector<2x32xf32> to vector<1x2x32xf32>
    tpu.vector_store %arg4[%c3_44, %c0_45, %c0_46], %144 {strides = array<i32>} : memref<8x2x32xf32, #tpu.memory_space<vmem>>, vector<1x2x32xf32>,
    %c4 = arith.constant 4 : index
    %c0_47 = arith.constant 0 : index
    %c0_48 = arith.constant 0 : index
    %145 = vector.load %arg0[%c4, %c0_47, %c0_48] : memref<8x2x16xf32, #tpu.memory_space<vmem>>, vector<1x2x16xf32>
    %146 = vector.shape_cast %145 : vector<1x2x16xf32> to vector<2x16xf32>
    %cst_49 = arith.constant dense<0.000000e+00> : vector<2x128xf32>
    %147 = tpu.matmul %146, %0, %cst_49 {dimension_numbers = #tpu.dot_dimension_numbers<[1], [0], [0], [1], [0, 0, 1, 1], [], []>} : vector<2x16xf32>, vector<16x128xf32>, vector<2x128xf32> -> vector<2x128xf32>
    %cst_50 = arith.constant dense<0.000000e+00> : vector<2x128xf32>
    %148 = tpu.matmul %141, %1, %cst_50 {dimension_numbers = #tpu.dot_dimension_numbers<[1], [0], [0], [1], [0, 0, 1, 1], [], []>} : vector<2x32xf32>, vector<32x128xf32>, vector<2x128xf32> -> vector<2x128xf32>
    %149 = arith.addf %147, %148 : vector<2x128xf32>
    %150 = vector.broadcast %2 : vector<1x128xf32> to vector<2x128xf32>
    %151 = arith.addf %149, %150 : vector<2x128xf32>
    %152 = vector.extract_strided_slice %151 {offsets = [0, 0], sizes = [2, 32], strides = [1, 1]} : vector<2x128xf32> to vector<2x32xf32>
    %153 = arith.negf %152 : vector<2x32xf32>
    %154 = math.exp %153 : vector<2x32xf32>
    %cst_51 = arith.constant 1.000000e+00 : f32
    %155 = vector.broadcast %cst_51 : f32 to vector<2x32xf32>
    %156 = arith.addf %155, %154 : vector<2x32xf32>
    %157 = arith.divf %155, %156 : vector<2x32xf32>
    %158 = vector.extract_strided_slice %151 {offsets = [0, 32], sizes = [2, 32], strides = [1, 1]} : vector<2x128xf32> to vector<2x32xf32>
    %159 = arith.negf %158 : vector<2x32xf32>
    %160 = math.exp %159 : vector<2x32xf32>
    %cst_52 = arith.constant 1.000000e+00 : f32
    %161 = vector.broadcast %cst_52 : f32 to vector<2x32xf32>
    %162 = arith.addf %161, %160 : vector<2x32xf32>
    %163 = arith.divf %161, %162 : vector<2x32xf32>
    %164 = vector.extract_strided_slice %151 {offsets = [0, 64], sizes = [2, 32], strides = [1, 1]} : vector<2x128xf32> to vector<2x32xf32>
    %165 = math.tanh %164 : vector<2x32xf32>
    %166 = vector.extract_strided_slice %151 {offsets = [0, 96], sizes = [2, 32], strides = [1, 1]} : vector<2x128xf32> to vector<2x32xf32>
    %167 = arith.negf %166 : vector<2x32xf32>
    %168 = math.exp %167 : vector<2x32xf32>
    %cst_53 = arith.constant 1.000000e+00 : f32
    %169 = vector.broadcast %cst_53 : f32 to vector<2x32xf32>
    %170 = arith.addf %169, %168 : vector<2x32xf32>
    %171 = arith.divf %169, %170 : vector<2x32xf32>
    %172 = arith.mulf %163, %139 : vector<2x32xf32>
    %173 = arith.mulf %157, %165 : vector<2x32xf32>
    %174 = arith.addf %172, %173 : vector<2x32xf32>
    %175 = math.tanh %174 : vector<2x32xf32>
    %176 = arith.mulf %171, %175 : vector<2x32xf32>
    %c4_54 = arith.constant 4 : index
    %c0_55 = arith.constant 0 : index
    %c0_56 = arith.constant 0 : index
    %177 = vector.load %arg4[%c4_54, %c0_55, %c0_56] : memref<8x2x32xf32, #tpu.memory_space<vmem>>, vector<1x2x32xf32>
    %178 = vector.shape_cast %177 : vector<1x2x32xf32> to vector<2x32xf32>
    %179 = vector.shape_cast %176 : vector<2x32xf32> to vector<1x2x32xf32>
    tpu.vector_store %arg4[%c4_54, %c0_55, %c0_56], %179 {strides = array<i32>} : memref<8x2x32xf32, #tpu.memory_space<vmem>>, vector<1x2x32xf32>,
    %c5 = arith.constant 5 : index
    %c0_57 = arith.constant 0 : index
    %c0_58 = arith.constant 0 : index
    %180 = vector.load %arg0[%c5, %c0_57, %c0_58] : memref<8x2x16xf32, #tpu.memory_space<vmem>>, vector<1x2x16xf32>
    %181 = vector.shape_cast %180 : vector<1x2x16xf32> to vector<2x16xf32>
    %cst_59 = arith.constant dense<0.000000e+00> : vector<2x128xf32>
    %182 = tpu.matmul %181, %0, %cst_59 {dimension_numbers = #tpu.dot_dimension_numbers<[1], [0], [0], [1], [0, 0, 1, 1], [], []>} : vector<2x16xf32>, vector<16x128xf32>, vector<2x128xf32> -> vector<2x128xf32>
    %cst_60 = arith.constant dense<0.000000e+00> : vector<2x128xf32>
    %183 = tpu.matmul %176, %1, %cst_60 {dimension_numbers = #tpu.dot_dimension_numbers<[1], [0], [0], [1], [0, 0, 1, 1], [], []>} : vector<2x32xf32>, vector<32x128xf32>, vector<2x128xf32> -> vector<2x128xf32>
    %184 = arith.addf %182, %183 : vector<2x128xf32>
    %185 = vector.broadcast %2 : vector<1x128xf32> to vector<2x128xf32>
    %186 = arith.addf %184, %185 : vector<2x128xf32>
    %187 = vector.extract_strided_slice %186 {offsets = [0, 0], sizes = [2, 32], strides = [1, 1]} : vector<2x128xf32> to vector<2x32xf32>
    %188 = arith.negf %187 : vector<2x32xf32>
    %189 = math.exp %188 : vector<2x32xf32>
    %cst_61 = arith.constant 1.000000e+00 : f32
    %190 = vector.broadcast %cst_61 : f32 to vector<2x32xf32>
    %191 = arith.addf %190, %189 : vector<2x32xf32>
    %192 = arith.divf %190, %191 : vector<2x32xf32>
    %193 = vector.extract_strided_slice %186 {offsets = [0, 32], sizes = [2, 32], strides = [1, 1]} : vector<2x128xf32> to vector<2x32xf32>
    %194 = arith.negf %193 : vector<2x32xf32>
    %195 = math.exp %194 : vector<2x32xf32>
    %cst_62 = arith.constant 1.000000e+00 : f32
    %196 = vector.broadcast %cst_62 : f32 to vector<2x32xf32>
    %197 = arith.addf %196, %195 : vector<2x32xf32>
    %198 = arith.divf %196, %197 : vector<2x32xf32>
    %199 = vector.extract_strided_slice %186 {offsets = [0, 64], sizes = [2, 32], strides = [1, 1]} : vector<2x128xf32> to vector<2x32xf32>
    %200 = math.tanh %199 : vector<2x32xf32>
    %201 = vector.extract_strided_slice %186 {offsets = [0, 96], sizes = [2, 32], strides = [1, 1]} : vector<2x128xf32> to vector<2x32xf32>
    %202 = arith.negf %201 : vector<2x32xf32>
    %203 = math.exp %202 : vector<2x32xf32>
    %cst_63 = arith.constant 1.000000e+00 : f32
    %204 = vector.broadcast %cst_63 : f32 to vector<2x32xf32>
    %205 = arith.addf %204, %203 : vector<2x32xf32>
    %206 = arith.divf %204, %205 : vector<2x32xf32>
    %207 = arith.mulf %198, %174 : vector<2x32xf32>
    %208 = arith.mulf %192, %200 : vector<2x32xf32>
    %209 = arith.addf %207, %208 : vector<2x32xf32>
    %210 = math.tanh %209 : vector<2x32xf32>
    %211 = arith.mulf %206, %210 : vector<2x32xf32>
    %c5_64 = arith.constant 5 : index
    %c0_65 = arith.constant 0 : index
    %c0_66 = arith.constant 0 : index
    %212 = vector.load %arg4[%c5_64, %c0_65, %c0_66] : memref<8x2x32xf32, #tpu.memory_space<vmem>>, vector<1x2x32xf32>
    %213 = vector.shape_cast %212 : vector<1x2x32xf32> to vector<2x32xf32>
    %214 = vector.shape_cast %211 : vector<2x32xf32> to vector<1x2x32xf32>
    tpu.vector_store %arg4[%c5_64, %c0_65, %c0_66], %214 {strides = array<i32>} : memref<8x2x32xf32, #tpu.memory_space<vmem>>, vector<1x2x32xf32>,
    %c6 = arith.constant 6 : index
    %c0_67 = arith.constant 0 : index
    %c0_68 = arith.constant 0 : index
    %215 = vector.load %arg0[%c6, %c0_67, %c0_68] : memref<8x2x16xf32, #tpu.memory_space<vmem>>, vector<1x2x16xf32>
    %216 = vector.shape_cast %215 : vector<1x2x16xf32> to vector<2x16xf32>
    %cst_69 = arith.constant dense<0.000000e+00> : vector<2x128xf32>
    %217 = tpu.matmul %216, %0, %cst_69 {dimension_numbers = #tpu.dot_dimension_numbers<[1], [0], [0], [1], [0, 0, 1, 1], [], []>} : vector<2x16xf32>, vector<16x128xf32>, vector<2x128xf32> -> vector<2x128xf32>
    %cst_70 = arith.constant dense<0.000000e+00> : vector<2x128xf32>
    %218 = tpu.matmul %211, %1, %cst_70 {dimension_numbers = #tpu.dot_dimension_numbers<[1], [0], [0], [1], [0, 0, 1, 1], [], []>} : vector<2x32xf32>, vector<32x128xf32>, vector<2x128xf32> -> vector<2x128xf32>
    %219 = arith.addf %217, %218 : vector<2x128xf32>
    %220 = vector.broadcast %2 : vector<1x128xf32> to vector<2x128xf32>
    %221 = arith.addf %219, %220 : vector<2x128xf32>
    %222 = vector.extract_strided_slice %221 {offsets = [0, 0], sizes = [2, 32], strides = [1, 1]} : vector<2x128xf32> to vector<2x32xf32>
    %223 = arith.negf %222 : vector<2x32xf32>
    %224 = math.exp %223 : vector<2x32xf32>
    %cst_71 = arith.constant 1.000000e+00 : f32
    %225 = vector.broadcast %cst_71 : f32 to vector<2x32xf32>
    %226 = arith.addf %225, %224 : vector<2x32xf32>
    %227 = arith.divf %225, %226 : vector<2x32xf32>
    %228 = vector.extract_strided_slice %221 {offsets = [0, 32], sizes = [2, 32], strides = [1, 1]} : vector<2x128xf32> to vector<2x32xf32>
    %229 = arith.negf %228 : vector<2x32xf32>
    %230 = math.exp %229 : vector<2x32xf32>
    %cst_72 = arith.constant 1.000000e+00 : f32
    %231 = vector.broadcast %cst_72 : f32 to vector<2x32xf32>
    %232 = arith.addf %231, %230 : vector<2x32xf32>
    %233 = arith.divf %231, %232 : vector<2x32xf32>
    %234 = vector.extract_strided_slice %221 {offsets = [0, 64], sizes = [2, 32], strides = [1, 1]} : vector<2x128xf32> to vector<2x32xf32>
    %235 = math.tanh %234 : vector<2x32xf32>
    %236 = vector.extract_strided_slice %221 {offsets = [0, 96], sizes = [2, 32], strides = [1, 1]} : vector<2x128xf32> to vector<2x32xf32>
    %237 = arith.negf %236 : vector<2x32xf32>
    %238 = math.exp %237 : vector<2x32xf32>
    %cst_73 = arith.constant 1.000000e+00 : f32
    %239 = vector.broadcast %cst_73 : f32 to vector<2x32xf32>
    %240 = arith.addf %239, %238 : vector<2x32xf32>
    %241 = arith.divf %239, %240 : vector<2x32xf32>
    %242 = arith.mulf %233, %209 : vector<2x32xf32>
    %243 = arith.mulf %227, %235 : vector<2x32xf32>
    %244 = arith.addf %242, %243 : vector<2x32xf32>
    %245 = math.tanh %244 : vector<2x32xf32>
    %246 = arith.mulf %241, %245 : vector<2x32xf32>
    %c6_74 = arith.constant 6 : index
    %c0_75 = arith.constant 0 : index
    %c0_76 = arith.constant 0 : index
    %247 = vector.load %arg4[%c6_74, %c0_75, %c0_76] : memref<8x2x32xf32, #tpu.memory_space<vmem>>, vector<1x2x32xf32>
    %248 = vector.shape_cast %247 : vector<1x2x32xf32> to vector<2x32xf32>
    %249 = vector.shape_cast %246 : vector<2x32xf32> to vector<1x2x32xf32>
    tpu.vector_store %arg4[%c6_74, %c0_75, %c0_76], %249 {strides = array<i32>} : memref<8x2x32xf32, #tpu.memory_space<vmem>>, vector<1x2x32xf32>,
    %c7 = arith.constant 7 : index
    %c0_77 = arith.constant 0 : index
    %c0_78 = arith.constant 0 : index
    %250 = vector.load %arg0[%c7, %c0_77, %c0_78] : memref<8x2x16xf32, #tpu.memory_space<vmem>>, vector<1x2x16xf32>
    %251 = vector.shape_cast %250 : vector<1x2x16xf32> to vector<2x16xf32>
    %cst_79 = arith.constant dense<0.000000e+00> : vector<2x128xf32>
    %252 = tpu.matmul %251, %0, %cst_79 {dimension_numbers = #tpu.dot_dimension_numbers<[1], [0], [0], [1], [0, 0, 1, 1], [], []>} : vector<2x16xf32>, vector<16x128xf32>, vector<2x128xf32> -> vector<2x128xf32>
    %cst_80 = arith.constant dense<0.000000e+00> : vector<2x128xf32>
    %253 = tpu.matmul %246, %1, %cst_80 {dimension_numbers = #tpu.dot_dimension_numbers<[1], [0], [0], [1], [0, 0, 1, 1], [], []>} : vector<2x32xf32>, vector<32x128xf32>, vector<2x128xf32> -> vector<2x128xf32>
    %254 = arith.addf %252, %253 : vector<2x128xf32>
    %255 = vector.broadcast %2 : vector<1x128xf32> to vector<2x128xf32>
    %256 = arith.addf %254, %255 : vector<2x128xf32>
    %257 = vector.extract_strided_slice %256 {offsets = [0, 0], sizes = [2, 32], strides = [1, 1]} : vector<2x128xf32> to vector<2x32xf32>
    %258 = arith.negf %257 : vector<2x32xf32>
    %259 = math.exp %258 : vector<2x32xf32>
    %cst_81 = arith.constant 1.000000e+00 : f32
    %260 = vector.broadcast %cst_81 : f32 to vector<2x32xf32>
    %261 = arith.addf %260, %259 : vector<2x32xf32>
    %262 = arith.divf %260, %261 : vector<2x32xf32>
    %263 = vector.extract_strided_slice %256 {offsets = [0, 32], sizes = [2, 32], strides = [1, 1]} : vector<2x128xf32> to vector<2x32xf32>
    %264 = arith.negf %263 : vector<2x32xf32>
    %265 = math.exp %264 : vector<2x32xf32>
    %cst_82 = arith.constant 1.000000e+00 : f32
    %266 = vector.broadcast %cst_82 : f32 to vector<2x32xf32>
    %267 = arith.addf %266, %265 : vector<2x32xf32>
    %268 = arith.divf %266, %267 : vector<2x32xf32>
    %269 = vector.extract_strided_slice %256 {offsets = [0, 64], sizes = [2, 32], strides = [1, 1]} : vector<2x128xf32> to vector<2x32xf32>
    %270 = math.tanh %269 : vector<2x32xf32>
    %271 = vector.extract_strided_slice %256 {offsets = [0, 96], sizes = [2, 32], strides = [1, 1]} : vector<2x128xf32> to vector<2x32xf32>
    %272 = arith.negf %271 : vector<2x32xf32>
    %273 = math.exp %272 : vector<2x32xf32>
    %cst_83 = arith.constant 1.000000e+00 : f32
    %274 = vector.broadcast %cst_83 : f32 to vector<2x32xf32>
    %275 = arith.addf %274, %273 : vector<2x32xf32>
    %276 = arith.divf %274, %275 : vector<2x32xf32>
    %277 = arith.mulf %268, %244 : vector<2x32xf32>
    %278 = arith.mulf %262, %270 : vector<2x32xf32>
    %279 = arith.addf %277, %278 : vector<2x32xf32>
    %280 = math.tanh %279 : vector<2x32xf32>
    %281 = arith.mulf %276, %280 : vector<2x32xf32>
    %c7_84 = arith.constant 7 : index
    %c0_85 = arith.constant 0 : index
    %c0_86 = arith.constant 0 : index
    %282 = vector.load %arg4[%c7_84, %c0_85, %c0_86] : memref<8x2x32xf32, #tpu.memory_space<vmem>>, vector<1x2x32xf32>
    %283 = vector.shape_cast %282 : vector<1x2x32xf32> to vector<2x32xf32>
    %284 = vector.shape_cast %281 : vector<2x32xf32> to vector<1x2x32xf32>
    tpu.vector_store %arg4[%c7_84, %c0_85, %c0_86], %284 {strides = array<i32>} : memref<8x2x32xf32, #tpu.memory_space<vmem>>, vector<1x2x32xf32>,
    %c0_87 = arith.constant 0 : index
    %c0_88 = arith.constant 0 : index
    %285 = vector.load %arg5[%c0_87, %c0_88] : memref<2x32xf32, #tpu.memory_space<vmem>>, vector<2x32xf32>
    tpu.vector_store %arg5[%c0_87, %c0_88], %281 {strides = array<i32>} : memref<2x32xf32, #tpu.memory_space<vmem>>, vector<2x32xf32>,
    %c0_89 = arith.constant 0 : index
    %c0_90 = arith.constant 0 : index
    %286 = vector.load %arg6[%c0_89, %c0_90] : memref<2x32xf32, #tpu.memory_space<vmem>>, vector<2x32xf32>
    tpu.vector_store %arg6[%c0_89, %c0_90], %279 {strides = array<i32>} : memref<2x32xf32, #tpu.memory_space<vmem>>, vector<2x32xf32>,
    return
  }
}

</mosaic_0001>

<llo_original>
// kernel: _seq2seq_impl.2
$region0: #{_seq2seq_impl.2}
  #allocation0 [shape = 'u32[]', space=smem, size = 0x4, offset = 0x4, fixed_abs, tag = 'smem constant byte address 0x4 - core index']
  #allocation1 [shape = 'u32[72,128]{1,0:T(1,128)}', space=vmem, size = 0x9000, scoped, tag = 'internal scratch']
  %s0 = inlined_call_operand.vmem [shape: f32[8,2,16], index: 0, kind: input, shape index: {}]
  %s1 = inlined_call_operand.vmem [shape: f32[16,128], index: 1, kind: input, shape index: {}]
  %s2 = inlined_call_operand.vmem [shape: f32[32,128], index: 2, kind: input, shape index: {}]
  %s3 = inlined_call_operand.vmem [shape: f32[1,128], index: 3, kind: input, shape index: {}]
  %s4 = inlined_call_operand.vmem [shape: f32[8,2,32], index: 4, kind: output, shape index: {0}]
  %s5 = inlined_call_operand.vmem [shape: f32[2,32], index: 5, kind: output, shape index: {1}]
  %s6 = inlined_call_operand.vmem [shape: f32[2,32], index: 6, kind: output, shape index: {2}]
  %7 = xla_tuple %s4, %s5, %s6
  %s8 = sld [smem:[#allocation0]]
  $region42: #{_seq2seq_impl.2} parent=0
    _
  %s10 = ssub.s32 1, %s8
  %s11 = scalar_select 0, %s10, %s8
  // Predicated region
  $region2: #{_seq2seq_impl.2} parent=0 // pred_check
    _
  $region3: #{_seq2seq_impl.2} parent=0 // pred_check_branch
    %13 = sbr.rel (0) target = $region5
  $region4: #{_seq2seq_impl.2} parent=0 // pred_region
    _
  $region5: #{_seq2seq_impl.2} parent=0 // pred_fallthru
    _
  // Predicated region
  $region6: #{_seq2seq_impl.2} parent=0 // pred_check
    _
  $region7: #{_seq2seq_impl.2} parent=0 // pred_check_branch
    %15 = sbr.rel (0) target = $region9
  $region8: #{_seq2seq_impl.2} parent=0 // pred_region
    _
  $region9: #{_seq2seq_impl.2} parent=0 // pred_fallthru
    _
  // Predicated region
  $region10: #{_seq2seq_impl.2} parent=0 // pred_check
    _
  $region11: #{_seq2seq_impl.2} parent=0 // pred_check_branch
    %17 = sbr.rel (0) target = $region13
  $region12: #{_seq2seq_impl.2} parent=0 // pred_region
    _
  $region13: #{_seq2seq_impl.2} parent=0 // pred_fallthru
    _
  // Predicated region
  $region14: #{_seq2seq_impl.2} parent=0 // pred_check
    _
  $region15: #{_seq2seq_impl.2} parent=0 // pred_check_branch
    %19 = sbr.rel (0) target = $region17
  $region16: #{_seq2seq_impl.2} parent=0 // pred_region
    _
  $region17: #{_seq2seq_impl.2} parent=0 // pred_fallthru
    _
  %v20 = vld [vmem:[%s1] sm:$0xff]
  %v21 = vld [vmem:[%s1 + $0x8] sm:$0xff]
  %v22 = vld [vmem:[%s2] sm:$0xff]
  %v23 = vld [vmem:[%s2 + $0x8] sm:$0xff]
  %v24 = vld [vmem:[%s2 + $0x10] sm:$0xff]
  %v25 = vld [vmem:[%s2 + $0x18] sm:$0xff]
  %v26 = vld [vmem:[%s3] sm:$0x1]
  %v27 = vld [vmem:[%s0] sm:$0x3]
  %vm28 = vcmask 261120
  %v30 = vsel %vm28, 0.0, 0
  %32 = vmatpush.msra.mxu0 0.0
  %33 = vmatpush.msra.mxu0 0.0
  %34 = vmatpush.msra.mxu0 0.0
  %35 = vmatpush.msra.mxu0 0.0
  %36 = vmatpush.msra.mxu0 0.0
  %37 = vmatpush.msra.mxu0 0.0
  %38 = vmatpush.msra.mxu0 0.0
  %39 = vmatpush.msra.mxu0 0.0
  %40 = vmatpush.msra.mxu0 0.0
  %41 = vmatpush.msra.mxu0 0.0
  %42 = vmatpush.msra.mxu0 0.0
  %43 = vmatpush.msra.mxu0 0.0
  %44 = vmatpush.msra.mxu0 %v25
  %45 = vmatpush.msra.mxu0 %v24
  %46 = vmatpush.msra.mxu0 %v23
  %47 = vmatpush.msra.mxu0 %v22
  %48 = vmatmul.f32.gmra.mxu0 %v30
  %v49 = vpop.f32.mrf.mxu0
  %v50 = vadd.f32 0.0, %v49
  %51 = vdwg.mxu0
  %vm52 = vcmask 130048
  %v54 = vsel %vm52, %v27, 0
  %56 = vmatpush.msra.mxu0 0.0
  %57 = vmatpush.msra.mxu0 0.0
  %58 = vmatpush.msra.mxu0 0.0
  %59 = vmatpush.msra.mxu0 0.0
  %60 = vmatpush.msra.mxu0 0.0
  %61 = vmatpush.msra.mxu0 0.0
  %62 = vmatpush.msra.mxu0 0.0
  %63 = vmatpush.msra.mxu0 0.0
  %64 = vmatpush.msra.mxu0 0.0
  %65 = vmatpush.msra.mxu0 0.0
  %66 = vmatpush.msra.mxu0 0.0
  %67 = vmatpush.msra.mxu0 0.0
  %68 = vmatpush.msra.mxu0 0.0
  %69 = vmatpush.msra.mxu0 0.0
  %70 = vmatpush.msra.mxu0 %v21
  %71 = vmatpush.msra.mxu0 %v20
  %72 = vmatmul.f32.gmra.mxu0 %v54
  %v73 = vpop.f32.mrf.mxu0
  %v74 = vadd.f32 %v50, %v73
  %75 = vdwg.mxu0
  %v77 = vperm.slane %v26, 0
  %v79 = vadd.f32 %v74, %v77
  %v80 = vxor.u32 %v79, 2147483648
  %v81 = vmul.f32 %v80, 1.442695
  %v82 = vpow.pop %v81
  %v83 = vadd.f32 %v82, 1.0
  %v84 = vrcp.pop %v83
  %v85 = vmul.f32 %v83, %v84
  %v86 = vsub.f32 1.0, %v85
  %v87 = vmul.f32 %v84, %v86
  %v88 = vadd.f32 %v84, %v87
  %vm89 = vweird.f32 %v83
  %vm90 = vweird.f32 %v84
  %vm91 = vmor %vm89, %vm90
  %v92 = vsel %vm91, %v84, %v88
  %v93 = vand.u32 2147483647, %v83
  %vm94 = vcmp.eq.f32.partialorder %v93, 8.507059e+37
  %v95 = vand.u32 %v83, 2147483648
  %v96 = vor.u32 1.1754944e-38, %v95
  %v97 = vsel %vm94, %v96, %v92
  %v98 = vmul.f32 1.0, %v97
  %v99 = vtanh.pop %v79
  %v100 = vmul.f32 %v98, 0.0
  %102 = vrot.lane.b32.xlu0 %v99, 64
  %v103 = vpop.permute.xlu0 %102
  %v105 = vmul.f32 %v98, %v103
  %107 = vrot.lane.b32.xlu0 %v105, 32
  %v108 = vpop.permute.xlu0 %107
  %v110 = vadd.f32 %v100, %v108
  %v111 = vtanh.pop %v110
  %113 = vrot.lane.b32.xlu0 %v111, 64
  %v114 = vpop.permute.xlu0 %113
  %v116 = vmul.f32 %v98, %v114
  %118 = vrot.lane.b32.xlu0 %v116, 32
  %v119 = vpop.permute.xlu0 %118
  %vm121 = vcmask 254976
  %122 = vst.msk [vmem:[%s4] sm:$0x3] %vm121, %v119
  %s123 = scalar_lea.vmem %s0, 2
  %v124 = vld [vmem:[%s123] sm:$0x3]
  %v125 = vsel %vm28, %v119, 0
  %127 = vmatpush.msra.mxu0 0.0
  %128 = vmatpush.msra.mxu0 0.0
  %129 = vmatpush.msra.mxu0 0.0
  %130 = vmatpush.msra.mxu0 0.0
  %131 = vmatpush.msra.mxu0 0.0
  %132 = vmatpush.msra.mxu0 0.0
  %133 = vmatpush.msra.mxu0 0.0
  %134 = vmatpush.msra.mxu0 0.0
  %135 = vmatpush.msra.mxu0 0.0
  %136 = vmatpush.msra.mxu0 0.0
  %137 = vmatpush.msra.mxu0 0.0
  %138 = vmatpush.msra.mxu0 0.0
  %139 = vmatpush.msra.mxu0 %v25
  %140 = vmatpush.msra.mxu0 %v24
  %141 = vmatpush.msra.mxu0 %v23
  %142 = vmatpush.msra.mxu0 %v22
  %143 = vmatmul.f32.gmra.mxu0 %v125
  %v144 = vpop.f32.mrf.mxu0
  %v145 = vadd.f32 0.0, %v144
  %146 = vdwg.mxu0
  %v148 = vsel %vm52, %v124, 0
  %150 = vmatpush.msra.mxu0 0.0
  %151 = vmatpush.msra.mxu0 0.0
  %152 = vmatpush.msra.mxu0 0.0
  %153 = vmatpush.msra.mxu0 0.0
  %154 = vmatpush.msra.mxu0 0.0
  %155 = vmatpush.msra.mxu0 0.0
  %156 = vmatpush.msra.mxu0 0.0
  %157 = vmatpush.msra.mxu0 0.0
  %158 = vmatpush.msra.mxu0 0.0
  %159 = vmatpush.msra.mxu0 0.0
  %160 = vmatpush.msra.mxu0 0.0
  %161 = vmatpush.msra.mxu0 0.0
  %162 = vmatpush.msra.mxu0 0.0
  %163 = vmatpush.msra.mxu0 0.0
  %164 = vmatpush.msra.mxu0 %v21
  %165 = vmatpush.msra.mxu0 %v20
  %166 = vmatmul.f32.gmra.mxu0 %v148
  %v167 = vpop.f32.mrf.mxu0
  %v168 = vadd.f32 %v145, %v167
  %169 = vdwg.mxu0
  %v170 = vadd.f32 %v168, %v77
  %v171 = vxor.u32 %v170, 2147483648
  %v172 = vmul.f32 %v171, 1.442695
  %v173 = vpow.pop %v172
  %v174 = vadd.f32 %v173, 1.0
  %v175 = vrcp.pop %v174
  %v176 = vmul.f32 %v174, %v175
  %v177 = vsub.f32 1.0, %v176
  %v178 = vmul.f32 %v175, %v177
  %v179 = vadd.f32 %v175, %v178
  %vm180 = vweird.f32 %v174
  %vm181 = vweird.f32 %v175
  %vm182 = vmor %vm180, %vm181
  %v183 = vsel %vm182, %v175, %v179
  %v184 = vand.u32 2147483647, %v174
  %vm185 = vcmp.eq.f32.partialorder %v184, 8.507059e+37
  %v186 = vand.u32 %v174, 2147483648
  %v187 = vor.u32 1.1754944e-38, %v186
  %v188 = vsel %vm185, %v187, %v183
  %v189 = vmul.f32 1.0, %v188
  %v190 = vtanh.pop %v170
  %v191 = vmul.f32 %v189, %v110
  %193 = vrot.lane.b32.xlu0 %v190, 64
  %v194 = vpop.permute.xlu0 %193
  %v196 = vmul.f32 %v189, %v194
  %198 = vrot.lane.b32.xlu0 %v196, 32
  %v199 = vpop.permute.xlu0 %198
  %v201 = vadd.f32 %v191, %v199
  %v202 = vtanh.pop %v201
  %204 = vrot.lane.b32.xlu0 %v202, 64
  %v205 = vpop.permute.xlu0 %204
  %v207 = vmul.f32 %v189, %v205
  %209 = vrot.lane.b32.xlu0 %v207, 32
  %v210 = vpop.permute.xlu0 %209
  %s212 = scalar_lea.vmem %s4, 2
  %213 = vst.msk [vmem:[%s212] sm:$0x3] %vm121, %v210
  %s214 = scalar_lea.vmem %s0, 4
  %v215 = vld [vmem:[%s214] sm:$0x3]
  %v216 = vsel %vm28, %v210, 0
  %218 = vmatpush.msra.mxu0 0.0
  %219 = vmatpush.msra.mxu0 0.0
  %220 = vmatpush.msra.mxu0 0.0
  %221 = vmatpush.msra.mxu0 0.0
  %222 = vmatpush.msra.mxu0 0.0
  %223 = vmatpush.msra.mxu0 0.0
  %224 = vmatpush.msra.mxu0 0.0
  %225 = vmatpush.msra.mxu0 0.0
  %226 = vmatpush.msra.mxu0 0.0
  %227 = vmatpush.msra.mxu0 0.0
  %228 = vmatpush.msra.mxu0 0.0
  %229 = vmatpush.msra.mxu0 0.0
  %230 = vmatpush.msra.mxu0 %v25
  %231 = vmatpush.msra.mxu0 %v24
  %232 = vmatpush.msra.mxu0 %v23
  %233 = vmatpush.msra.mxu0 %v22
  %234 = vmatmul.f32.gmra.mxu0 %v216
  %v235 = vpop.f32.mrf.mxu0
  %v236 = vadd.f32 0.0, %v235
  %237 = vdwg.mxu0
  %v239 = vsel %vm52, %v215, 0
  %241 = vmatpush.msra.mxu0 0.0
  %242 = vmatpush.msra.mxu0 0.0
  %243 = vmatpush.msra.mxu0 0.0
  %244 = vmatpush.msra.mxu0 0.0
  %245 = vmatpush.msra.mxu0 0.0
  %246 = vmatpush.msra.mxu0 0.0
  %247 = vmatpush.msra.mxu0 0.0
  %248 = vmatpush.msra.mxu0 0.0
  %249 = vmatpush.msra.mxu0 0.0
  %250 = vmatpush.msra.mxu0 0.0
  %251 = vmatpush.msra.mxu0 0.0
  %252 = vmatpush.msra.mxu0 0.0
  %253 = vmatpush.msra.mxu0 0.0
  %254 = vmatpush.msra.mxu0 0.0
  %255 = vmatpush.msra.mxu0 %v21
  %256 = vmatpush.msra.mxu0 %v20
  %257 = vmatmul.f32.gmra.mxu0 %v239
  %v258 = vpop.f32.mrf.mxu0
  %v259 = vadd.f32 %v236, %v258
  %260 = vdwg.mxu0
  %v261 = vadd.f32 %v259, %v77
  %v262 = vxor.u32 %v261, 2147483648
  %v263 = vmul.f32 %v262, 1.442695
  %v264 = vpow.pop %v263
  %v265 = vadd.f32 %v264, 1.0
  %v266 = vrcp.pop %v265
  %v267 = vmul.f32 %v265, %v266
  %v268 = vsub.f32 1.0, %v267
  %v269 = vmul.f32 %v266, %v268
  %v270 = vadd.f32 %v266, %v269
  %vm271 = vweird.f32 %v265
  %vm272 = vweird.f32 %v266
  %vm273 = vmor %vm271, %vm272
  %v274 = vsel %vm273, %v266, %v270
  %v275 = vand.u32 2147483647, %v265
  %vm276 = vcmp.eq.f32.partialorder %v275, 8.507059e+37
  %v277 = vand.u32 %v265, 2147483648
  %v278 = vor.u32 1.1754944e-38, %v277
  %v279 = vsel %vm276, %v278, %v274
  %v280 = vmul.f32 1.0, %v279
  %v281 = vtanh.pop %v261
  %v282 = vmul.f32 %v280, %v201
  %284 = vrot.lane.b32.xlu0 %v281, 64
  %v285 = vpop.permute.xlu0 %284
  %v287 = vmul.f32 %v280, %v285
  %289 = vrot.lane.b32.xlu0 %v287, 32
  %v290 = vpop.permute.xlu0 %289
  %v292 = vadd.f32 %v282, %v290
  %v293 = vtanh.pop %v292
  %295 = vrot.lane.b32.xlu0 %v293, 64
  %v296 = vpop.permute.xlu0 %295
  %v298 = vmul.f32 %v280, %v296
  %300 = vrot.lane.b32.xlu0 %v298, 32
  %v301 = vpop.permute.xlu0 %300
  %s303 = scalar_lea.vmem %s4, 4
  %304 = vst.msk [vmem:[%s303] sm:$0x3] %vm121, %v301
  %s305 = scalar_lea.vmem %s0, 6
  %v306 = vld [vmem:[%s305] sm:$0x3]
  %v307 = vsel %vm28, %v301, 0
  %309 = vmatpush.msra.mxu0 0.0
  %310 = vmatpush.msra.mxu0 0.0
  %311 = vmatpush.msra.mxu0 0.0
  %312 = vmatpush.msra.mxu0 0.0
  %313 = vmatpush.msra.mxu0 0.0
  %314 = vmatpush.msra.mxu0 0.0
  %315 = vmatpush.msra.mxu0 0.0
  %316 = vmatpush.msra.mxu0 0.0
  %317 = vmatpush.msra.mxu0 0.0
  %318 = vmatpush.msra.mxu0 0.0
  %319 = vmatpush.msra.mxu0 0.0
  %320 = vmatpush.msra.mxu0 0.0
  %321 = vmatpush.msra.mxu0 %v25
  %322 = vmatpush.msra.mxu0 %v24
  %323 = vmatpush.msra.mxu0 %v23
  %324 = vmatpush.msra.mxu0 %v22
  %325 = vmatmul.f32.gmra.mxu0 %v307
  %v326 = vpop.f32.mrf.mxu0
  %v327 = vadd.f32 0.0, %v326
  %328 = vdwg.mxu0
  %v330 = vsel %vm52, %v306, 0
  %332 = vmatpush.msra.mxu0 0.0
  %333 = vmatpush.msra.mxu0 0.0
  %334 = vmatpush.msra.mxu0 0.0
  %335 = vmatpush.msra.mxu0 0.0
  %336 = vmatpush.msra.mxu0 0.0
  %337 = vmatpush.msra.mxu0 0.0
  %338 = vmatpush.msra.mxu0 0.0
  %339 = vmatpush.msra.mxu0 0.0
  %340 = vmatpush.msra.mxu0 0.0
  %341 = vmatpush.msra.mxu0 0.0
  %342 = vmatpush.msra.mxu0 0.0
  %343 = vmatpush.msra.mxu0 0.0
  %344 = vmatpush.msra.mxu0 0.0
  %345 = vmatpush.msra.mxu0 0.0
  %346 = vmatpush.msra.mxu0 %v21
  %347 = vmatpush.msra.mxu0 %v20
  %348 = vmatmul.f32.gmra.mxu0 %v330
  %v349 = vpop.f32.mrf.mxu0
  %v350 = vadd.f32 %v327, %v349
  %351 = vdwg.mxu0
  %v352 = vadd.f32 %v350, %v77
  %v353 = vxor.u32 %v352, 2147483648
  %v354 = vmul.f32 %v353, 1.442695
  %v355 = vpow.pop %v354
  %v356 = vadd.f32 %v355, 1.0
  %v357 = vrcp.pop %v356
  %v358 = vmul.f32 %v356, %v357
  %v359 = vsub.f32 1.0, %v358
  %v360 = vmul.f32 %v357, %v359
  %v361 = vadd.f32 %v357, %v360
  %vm362 = vweird.f32 %v356
  %vm363 = vweird.f32 %v357
  %vm364 = vmor %vm362, %vm363
  %v365 = vsel %vm364, %v357, %v361
  %v366 = vand.u32 2147483647, %v356
  %vm367 = vcmp.eq.f32.partialorder %v366, 8.507059e+37
  %v368 = vand.u32 %v356, 2147483648
  %v369 = vor.u32 1.1754944e-38, %v368
  %v370 = vsel %vm367, %v369, %v365
  %v371 = vmul.f32 1.0, %v370
  %v372 = vtanh.pop %v352
  %v373 = vmul.f32 %v371, %v292
  %375 = vrot.lane.b32.xlu0 %v372, 64
  %v376 = vpop.permute.xlu0 %375
  %v378 = vmul.f32 %v371, %v376
  %380 = vrot.lane.b32.xlu0 %v378, 32
  %v381 = vpop.permute.xlu0 %380
  %v383 = vadd.f32 %v373, %v381
  %v384 = vtanh.pop %v383
  %386 = vrot.lane.b32.xlu0 %v384, 64
  %v387 = vpop.permute.xlu0 %386
  %v389 = vmul.f32 %v371, %v387
  %391 = vrot.lane.b32.xlu0 %v389, 32
  %v392 = vpop.permute.xlu0 %391
  %s394 = scalar_lea.vmem %s4, 6
  %395 = vst.msk [vmem:[%s394] sm:$0x3] %vm121, %v392
  %s396 = scalar_lea.vmem %s0, 8
  %v397 = vld [vmem:[%s396] sm:$0x3]
  %v398 = vsel %vm28, %v392, 0
  %400 = vmatpush.msra.mxu0 0.0
  %401 = vmatpush.msra.mxu0 0.0
  %402 = vmatpush.msra.mxu0 0.0
  %403 = vmatpush.msra.mxu0 0.0
  %404 = vmatpush.msra.mxu0 0.0
  %405 = vmatpush.msra.mxu0 0.0
  %406 = vmatpush.msra.mxu0 0.0
  %407 = vmatpush.msra.mxu0 0.0
  %408 = vmatpush.msra.mxu0 0.0
  %409 = vmatpush.msra.mxu0 0.0
  %410 = vmatpush.msra.mxu0 0.0
  %411 = vmatpush.msra.mxu0 0.0
  %412 = vmatpush.msra.mxu0 %v25
  %413 = vmatpush.msra.mxu0 %v24
  %414 = vmatpush.msra.mxu0 %v23
  %415 = vmatpush.msra.mxu0 %v22
  %416 = vmatmul.f32.gmra.mxu0 %v398
  %v417 = vpop.f32.mrf.mxu0
  %v418 = vadd.f32 0.0, %v417
  %419 = vdwg.mxu0
  %v421 = vsel %vm52, %v397, 0
  %423 = vmatpush.msra.mxu0 0.0
  %424 = vmatpush.msra.mxu0 0.0
  %425 = vmatpush.msra.mxu0 0.0
  %426 = vmatpush.msra.mxu0 0.0
  %427 = vmatpush.msra.mxu0 0.0
  %428 = vmatpush.msra.mxu0 0.0
  %429 = vmatpush.msra.mxu0 0.0
  %430 = vmatpush.msra.mxu0 0.0
  %431 = vmatpush.msra.mxu0 0.0
  %432 = vmatpush.msra.mxu0 0.0
  %433 = vmatpush.msra.mxu0 0.0
  %434 = vmatpush.msra.mxu0 0.0
  %435 = vmatpush.msra.mxu0 0.0
  %436 = vmatpush.msra.mxu0 0.0
  %437 = vmatpush.msra.mxu0 %v21
  %438 = vmatpush.msra.mxu0 %v20
  %439 = vmatmul.f32.gmra.mxu0 %v421
  %v440 = vpop.f32.mrf.mxu0
  %v441 = vadd.f32 %v418, %v440
  %442 = vdwg.mxu0
  %v443 = vadd.f32 %v441, %v77
  %v444 = vxor.u32 %v443, 2147483648
  %v445 = vmul.f32 %v444, 1.442695
  %v446 = vpow.pop %v445
  %v447 = vadd.f32 %v446, 1.0
  %v448 = vrcp.pop %v447
  %v449 = vmul.f32 %v447, %v448
  %v450 = vsub.f32 1.0, %v449
  %v451 = vmul.f32 %v448, %v450
  %v452 = vadd.f32 %v448, %v451
  %vm453 = vweird.f32 %v447
  %vm454 = vweird.f32 %v448
  %vm455 = vmor %vm453, %vm454
  %v456 = vsel %vm455, %v448, %v452
  %v457 = vand.u32 2147483647, %v447
  %vm458 = vcmp.eq.f32.partialorder %v457, 8.507059e+37
  %v459 = vand.u32 %v447, 2147483648
  %v460 = vor.u32 1.1754944e-38, %v459
  %v461 = vsel %vm458, %v460, %v456
  %v462 = vmul.f32 1.0, %v461
  %v463 = vtanh.pop %v443
  %v464 = vmul.f32 %v462, %v383
  %466 = vrot.lane.b32.xlu0 %v463, 64
  %v467 = vpop.permute.xlu0 %466
  %v469 = vmul.f32 %v462, %v467
  %471 = vrot.lane.b32.xlu0 %v469, 32
  %v472 = vpop.permute.xlu0 %471
  %v474 = vadd.f32 %v464, %v472
  %v475 = vtanh.pop %v474
  %477 = vrot.lane.b32.xlu0 %v475, 64
  %v478 = vpop.permute.xlu0 %477
  %v480 = vmul.f32 %v462, %v478
  %482 = vrot.lane.b32.xlu0 %v480, 32
  %v483 = vpop.permute.xlu0 %482
  %s485 = scalar_lea.vmem %s4, 8
  %486 = vst.msk [vmem:[%s485] sm:$0x3] %vm121, %v483
  %s487 = scalar_lea.vmem %s0, 10
  %v488 = vld [vmem:[%s487] sm:$0x3]
  %v489 = vsel %vm28, %v483, 0
  %491 = vmatpush.msra.mxu0 0.0
  %492 = vmatpush.msra.mxu0 0.0
  %493 = vmatpush.msra.mxu0 0.0
  %494 = vmatpush.msra.mxu0 0.0
  %495 = vmatpush.msra.mxu0 0.0
  %496 = vmatpush.msra.mxu0 0.0
  %497 = vmatpush.msra.mxu0 0.0
  %498 = vmatpush.msra.mxu0 0.0
  %499 = vmatpush.msra.mxu0 0.0
  %500 = vmatpush.msra.mxu0 0.0
  %501 = vmatpush.msra.mxu0 0.0
  %502 = vmatpush.msra.mxu0 0.0
  %503 = vmatpush.msra.mxu0 %v25
  %504 = vmatpush.msra.mxu0 %v24
  %505 = vmatpush.msra.mxu0 %v23
  %506 = vmatpush.msra.mxu0 %v22
  %507 = vmatmul.f32.gmra.mxu0 %v489
  %v508 = vpop.f32.mrf.mxu0
  %v509 = vadd.f32 0.0, %v508
  %510 = vdwg.mxu0
  %v512 = vsel %vm52, %v488, 0
  %514 = vmatpush.msra.mxu0 0.0
  %515 = vmatpush.msra.mxu0 0.0
  %516 = vmatpush.msra.mxu0 0.0
  %517 = vmatpush.msra.mxu0 0.0
  %518 = vmatpush.msra.mxu0 0.0
  %519 = vmatpush.msra.mxu0 0.0
  %520 = vmatpush.msra.mxu0 0.0
  %521 = vmatpush.msra.mxu0 0.0
  %522 = vmatpush.msra.mxu0 0.0
  %523 = vmatpush.msra.mxu0 0.0
  %524 = vmatpush.msra.mxu0 0.0
  %525 = vmatpush.msra.mxu0 0.0
  %526 = vmatpush.msra.mxu0 0.0
  %527 = vmatpush.msra.mxu0 0.0
  %528 = vmatpush.msra.mxu0 %v21
  %529 = vmatpush.msra.mxu0 %v20
  %530 = vmatmul.f32.gmra.mxu0 %v512
  %v531 = vpop.f32.mrf.mxu0
  %v532 = vadd.f32 %v509, %v531
  %533 = vdwg.mxu0
  %v534 = vadd.f32 %v532, %v77
  %v535 = vxor.u32 %v534, 2147483648
  %v536 = vmul.f32 %v535, 1.442695
  %v537 = vpow.pop %v536
  %v538 = vadd.f32 %v537, 1.0
  %v539 = vrcp.pop %v538
  %v540 = vmul.f32 %v538, %v539
  %v541 = vsub.f32 1.0, %v540
  %v542 = vmul.f32 %v539, %v541
  %v543 = vadd.f32 %v539, %v542
  %vm544 = vweird.f32 %v538
  %vm545 = vweird.f32 %v539
  %vm546 = vmor %vm544, %vm545
  %v547 = vsel %vm546, %v539, %v543
  %v548 = vand.u32 2147483647, %v538
  %vm549 = vcmp.eq.f32.partialorder %v548, 8.507059e+37
  %v550 = vand.u32 %v538, 2147483648
  %v551 = vor.u32 1.1754944e-38, %v550
  %v552 = vsel %vm549, %v551, %v547
  %v553 = vmul.f32 1.0, %v552
  %v554 = vtanh.pop %v534
  %v555 = vmul.f32 %v553, %v474
  %557 = vrot.lane.b32.xlu0 %v554, 64
  %v558 = vpop.permute.xlu0 %557
  %v560 = vmul.f32 %v553, %v558
  %562 = vrot.lane.b32.xlu0 %v560, 32
  %v563 = vpop.permute.xlu0 %562
  %v565 = vadd.f32 %v555, %v563
  %v566 = vtanh.pop %v565
  %568 = vrot.lane.b32.xlu0 %v566, 64
  %v569 = vpop.permute.xlu0 %568
  %v571 = vmul.f32 %v553, %v569
  %573 = vrot.lane.b32.xlu0 %v571, 32
  %v574 = vpop.permute.xlu0 %573
  %s576 = scalar_lea.vmem %s4, 10
  %577 = vst.msk [vmem:[%s576] sm:$0x3] %vm121, %v574
  %s578 = scalar_lea.vmem %s0, 12
  %v579 = vld [vmem:[%s578] sm:$0x3]
  %v580 = vsel %vm28, %v574, 0
  %582 = vmatpush.msra.mxu0 0.0
  %583 = vmatpush.msra.mxu0 0.0
  %584 = vmatpush.msra.mxu0 0.0
  %585 = vmatpush.msra.mxu0 0.0
  %586 = vmatpush.msra.mxu0 0.0
  %587 = vmatpush.msra.mxu0 0.0
  %588 = vmatpush.msra.mxu0 0.0
  %589 = vmatpush.msra.mxu0 0.0
  %590 = vmatpush.msra.mxu0 0.0
  %591 = vmatpush.msra.mxu0 0.0
  %592 = vmatpush.msra.mxu0 0.0
  %593 = vmatpush.msra.mxu0 0.0
  %594 = vmatpush.msra.mxu0 %v25
  %595 = vmatpush.msra.mxu0 %v24
  %596 = vmatpush.msra.mxu0 %v23
  %597 = vmatpush.msra.mxu0 %v22
  %598 = vmatmul.f32.gmra.mxu0 %v580
  %v599 = vpop.f32.mrf.mxu0
  %v600 = vadd.f32 0.0, %v599
  %601 = vdwg.mxu0
  %v603 = vsel %vm52, %v579, 0
  %605 = vmatpush.msra.mxu0 0.0
  %606 = vmatpush.msra.mxu0 0.0
  %607 = vmatpush.msra.mxu0 0.0
  %608 = vmatpush.msra.mxu0 0.0
  %609 = vmatpush.msra.mxu0 0.0
  %610 = vmatpush.msra.mxu0 0.0
  %611 = vmatpush.msra.mxu0 0.0
  %612 = vmatpush.msra.mxu0 0.0
  %613 = vmatpush.msra.mxu0 0.0
  %614 = vmatpush.msra.mxu0 0.0
  %615 = vmatpush.msra.mxu0 0.0
  %616 = vmatpush.msra.mxu0 0.0
  %617 = vmatpush.msra.mxu0 0.0
  %618 = vmatpush.msra.mxu0 0.0
  %619 = vmatpush.msra.mxu0 %v21
  %620 = vmatpush.msra.mxu0 %v20
  %621 = vmatmul.f32.gmra.mxu0 %v603
  %v622 = vpop.f32.mrf.mxu0
  %v623 = vadd.f32 %v600, %v622
  %624 = vdwg.mxu0
  %v625 = vadd.f32 %v623, %v77
  %v626 = vxor.u32 %v625, 2147483648
  %v627 = vmul.f32 %v626, 1.442695
  %v628 = vpow.pop %v627
  %v629 = vadd.f32 %v628, 1.0
  %v630 = vrcp.pop %v629
  %v631 = vmul.f32 %v629, %v630
  %v632 = vsub.f32 1.0, %v631
  %v633 = vmul.f32 %v630, %v632
  %v634 = vadd.f32 %v630, %v633
  %vm635 = vweird.f32 %v629
  %vm636 = vweird.f32 %v630
  %vm637 = vmor %vm635, %vm636
  %v638 = vsel %vm637, %v630, %v634
  %v639 = vand.u32 2147483647, %v629
  %vm640 = vcmp.eq.f32.partialorder %v639, 8.507059e+37
  %v641 = vand.u32 %v629, 2147483648
  %v642 = vor.u32 1.1754944e-38, %v641
  %v643 = vsel %vm640, %v642, %v638
  %v644 = vmul.f32 1.0, %v643
  %v645 = vtanh.pop %v625
  %v646 = vmul.f32 %v644, %v565
  %648 = vrot.lane.b32.xlu0 %v645, 64
  %v649 = vpop.permute.xlu0 %648
  %v651 = vmul.f32 %v644, %v649
  %653 = vrot.lane.b32.xlu0 %v651, 32
  %v654 = vpop.permute.xlu0 %653
  %v656 = vadd.f32 %v646, %v654
  %v657 = vtanh.pop %v656
  %659 = vrot.lane.b32.xlu0 %v657, 64
  %v660 = vpop.permute.xlu0 %659
  %v662 = vmul.f32 %v644, %v660
  %664 = vrot.lane.b32.xlu0 %v662, 32
  %v665 = vpop.permute.xlu0 %664
  %s667 = scalar_lea.vmem %s4, 12
  %668 = vst.msk [vmem:[%s667] sm:$0x3] %vm121, %v665
  %s669 = scalar_lea.vmem %s0, 14
  %v670 = vld [vmem:[%s669] sm:$0x3]
  %v671 = vsel %vm28, %v665, 0
  %673 = vmatpush.msra.mxu0 0.0
  %674 = vmatpush.msra.mxu0 0.0
  %675 = vmatpush.msra.mxu0 0.0
  %676 = vmatpush.msra.mxu0 0.0
  %677 = vmatpush.msra.mxu0 0.0
  %678 = vmatpush.msra.mxu0 0.0
  %679 = vmatpush.msra.mxu0 0.0
  %680 = vmatpush.msra.mxu0 0.0
  %681 = vmatpush.msra.mxu0 0.0
  %682 = vmatpush.msra.mxu0 0.0
  %683 = vmatpush.msra.mxu0 0.0
  %684 = vmatpush.msra.mxu0 0.0
  %685 = vmatpush.msra.mxu0 %v25
  %686 = vmatpush.msra.mxu0 %v24
  %687 = vmatpush.msra.mxu0 %v23
  %688 = vmatpush.msra.mxu0 %v22
  %689 = vmatmul.f32.gmra.mxu0 %v671
  %v690 = vpop.f32.mrf.mxu0
  %v691 = vadd.f32 0.0, %v690
  %692 = vdwg.mxu0
  %v694 = vsel %vm52, %v670, 0
  %696 = vmatpush.msra.mxu0 0.0
  %697 = vmatpush.msra.mxu0 0.0
  %698 = vmatpush.msra.mxu0 0.0
  %699 = vmatpush.msra.mxu0 0.0
  %700 = vmatpush.msra.mxu0 0.0
  %701 = vmatpush.msra.mxu0 0.0
  %702 = vmatpush.msra.mxu0 0.0
  %703 = vmatpush.msra.mxu0 0.0
  %704 = vmatpush.msra.mxu0 0.0
  %705 = vmatpush.msra.mxu0 0.0
  %706 = vmatpush.msra.mxu0 0.0
  %707 = vmatpush.msra.mxu0 0.0
  %708 = vmatpush.msra.mxu0 0.0
  %709 = vmatpush.msra.mxu0 0.0
  %710 = vmatpush.msra.mxu0 %v21
  %711 = vmatpush.msra.mxu0 %v20
  %712 = vmatmul.f32.gmra.mxu0 %v694
  %v713 = vpop.f32.mrf.mxu0
  %v714 = vadd.f32 %v691, %v713
  %715 = vdwg.mxu0
  %v716 = vadd.f32 %v714, %v77
  %v717 = vxor.u32 %v716, 2147483648
  %v718 = vmul.f32 %v717, 1.442695
  %v719 = vpow.pop %v718
  %v720 = vadd.f32 %v719, 1.0
  %v721 = vrcp.pop %v720
  %v722 = vmul.f32 %v720, %v721
  %v723 = vsub.f32 1.0, %v722
  %v724 = vmul.f32 %v721, %v723
  %v725 = vadd.f32 %v721, %v724
  %vm726 = vweird.f32 %v720
  %vm727 = vweird.f32 %v721
  %vm728 = vmor %vm726, %vm727
  %v729 = vsel %vm728, %v721, %v725
  %v730 = vand.u32 2147483647, %v720
  %vm731 = vcmp.eq.f32.partialorder %v730, 8.507059e+37
  %v732 = vand.u32 %v720, 2147483648
  %v733 = vor.u32 1.1754944e-38, %v732
  %v734 = vsel %vm731, %v733, %v729
  %v735 = vmul.f32 1.0, %v734
  %v736 = vtanh.pop %v716
  %v737 = vmul.f32 %v735, %v656
  %739 = vrot.lane.b32.xlu0 %v736, 64
  %v740 = vpop.permute.xlu0 %739
  %v742 = vmul.f32 %v735, %v740
  %744 = vrot.lane.b32.xlu0 %v742, 32
  %v745 = vpop.permute.xlu0 %744
  %v747 = vadd.f32 %v737, %v745
  %v748 = vtanh.pop %v747
  %750 = vrot.lane.b32.xlu0 %v748, 64
  %v751 = vpop.permute.xlu0 %750
  %v753 = vmul.f32 %v735, %v751
  %755 = vrot.lane.b32.xlu0 %v753, 32
  %v756 = vpop.permute.xlu0 %755
  %s758 = scalar_lea.vmem %s4, 14
  %759 = vst.msk [vmem:[%s758] sm:$0x3] %vm121, %v756
  %760 = vst.msk [vmem:[%s5] sm:$0x3] %vm121, %v756
  %762 = vrot.lane.b32.xlu0 %v747, 96
  %v763 = vpop.permute.xlu0 %762
  %765 = vst.msk [vmem:[%s6] sm:$0x3] %vm121, %v763
  // Predicated region
  $region18: #{_seq2seq_impl.2} parent=0 // pred_check
    _
  $region19: #{_seq2seq_impl.2} parent=0 // pred_check_branch
    %767 = sbr.rel (0) target = $region21
  $region20: #{_seq2seq_impl.2} parent=0 // pred_region
    _
  $region21: #{_seq2seq_impl.2} parent=0 // pred_fallthru
    _
  // Predicated region
  $region22: #{_seq2seq_impl.2} parent=0 // pred_check
    _
  $region23: #{_seq2seq_impl.2} parent=0 // pred_check_branch
    %769 = sbr.rel (0) target = $region25
  $region24: #{_seq2seq_impl.2} parent=0 // pred_region
    _
  $region25: #{_seq2seq_impl.2} parent=0 // pred_fallthru
    _
  // Predicated region
  $region26: #{_seq2seq_impl.2} parent=0 // pred_check
    _
  $region27: #{_seq2seq_impl.2} parent=0 // pred_check_branch
    %771 = sbr.rel (0) target = $region29
  $region28: #{_seq2seq_impl.2} parent=0 // pred_region
    _
  $region29: #{_seq2seq_impl.2} parent=0 // pred_fallthru
    _
  // Predicated region
  $region30: #{_seq2seq_impl.2} parent=0 // pred_check
    _
  $region31: #{_seq2seq_impl.2} parent=0 // pred_check_branch
    %773 = sbr.rel (0) target = $region33
  $region32: #{_seq2seq_impl.2} parent=0 // pred_region
    _
  $region33: #{_seq2seq_impl.2} parent=0 // pred_fallthru
    _
  // Predicated region
  $region34: #{_seq2seq_impl.2} parent=0 // pred_check
    _
  $region35: #{_seq2seq_impl.2} parent=0 // pred_check_branch
    %775 = sbr.rel (0) target = $region37
  $region36: #{_seq2seq_impl.2} parent=0 // pred_region
    _
  $region37: #{_seq2seq_impl.2} parent=0 // pred_fallthru
    _
  // Predicated region
  $region38: #{_seq2seq_impl.2} parent=0 // pred_check
    _
  $region39: #{_seq2seq_impl.2} parent=0 // pred_check_branch
    %777 = sbr.rel (0) target = $region41
  $region40: #{_seq2seq_impl.2} parent=0 // pred_region
    _
  $region41: #{_seq2seq_impl.2} parent=0 // pred_fallthru
    _

// kernel: _seq2seq_impl.3
$region0: #{_seq2seq_impl.3}
  #allocation0 [shape = 'u32[]', space=smem, size = 0x4, offset = 0x4, fixed_abs, tag = 'smem constant byte address 0x4 - core index']
  #allocation1 [shape = 'u32[72,128]{1,0:T(1,128)}', space=vmem, size = 0x9000, scoped, tag = 'internal scratch']
  %s0 = inlined_call_operand.vmem [shape: s32[8], index: 0, kind: input, shape index: {}]
  %s1 = inlined_call_operand.vmem [shape: f32[8,2,16], index: 1, kind: input, shape index: {}]
  %s2 = inlined_call_operand.vmem [shape: f32[2,8,32], index: 2, kind: input, shape index: {}]
  %s3 = inlined_call_operand.vmem [shape: f32[2,32], index: 3, kind: input, shape index: {}]
  %s4 = inlined_call_operand.vmem [shape: f32[2,32], index: 4, kind: input, shape index: {}]
  %s5 = inlined_call_operand.vmem [shape: f32[16,128], index: 5, kind: input, shape index: {}]
  %s6 = inlined_call_operand.vmem [shape: f32[32,128], index: 6, kind: input, shape index: {}]
  %s7 = inlined_call_operand.vmem [shape: f32[32,128], index: 7, kind: input, shape index: {}]
  %s8 = inlined_call_operand.vmem [shape: f32[1,128], index: 8, kind: input, shape index: {}]
  %s9 = inlined_call_operand.vmem [shape: f32[32,128], index: 9, kind: input, shape index: {}]
  %s10 = inlined_call_operand.vmem [shape: f32[1,128], index: 10, kind: input, shape index: {}]
  %s11 = inlined_call_operand.vmem [shape: f32[128,16], index: 11, kind: input, shape index: {}]
  %s12 = inlined_call_operand.hbm [shape: f32[8,2,128], index: 12, kind: output, shape index: {}]
  %s13 = sld [smem:[#allocation0]]
  $region69: #{_seq2seq_impl.3} parent=0
    _
  %s15 = ssub.s32 1, %s13
  %s16 = scalar_select 0, %s15, %s13
  $region1: #{_seq2seq_impl.3} parent=0
    #allocation2 [shape = 'u8[512]{0}', space=smem, size = 0x200, scoped, tag = 'input window, operand 0, single buffered']
    #allocation3 [shape = 's32[1]{0}', space=sflag, size = 0x4, scoped, tag = 'scoped memory for _seq2seq_impl.3']
    #allocation4 [shape = 's32[1]{0}', space=sflag, size = 0x4, scoped, tag = 'scoped memory for _seq2seq_impl.3']
    #allocation5 [shape = 'u8[8192]{0}', space=vmem, size = 0x2000, scoped, tag = 'output window, operand 0, single buffered']
    %17 = vsyncpa [#allocation4], 0
    %18 = vsyncpa [#allocation3], 0
    // Predicated region
    $region2: #{_seq2seq_impl.3} parent=1 // pred_check
      _
    $region3: #{_seq2seq_impl.3} parent=1 // pred_check_branch
      %20 = sbr.rel (0) target = $region5
    $region4: #{_seq2seq_impl.3} parent=1 // pred_region
      %22 = vsyncadd [#allocation4], 0
      %s24 = sshll.u32 %s0, 4
      %s25 = int_to_ptr.vmem [resolvable:$true] %s24
      %27 = dma.vmem_to_smem %s25, 16, [#allocation2], [#allocation4]
    $region5: #{_seq2seq_impl.3} parent=1 // pred_fallthru
      _
    // Predicated region
    $region6: #{_seq2seq_impl.3} parent=1 // pred_check
      _
    $region7: #{_seq2seq_impl.3} parent=1 // pred_check_branch
      %29 = sbr.rel (0) target = $region9
    $region8: #{_seq2seq_impl.3} parent=1 // pred_region
      _
    $region9: #{_seq2seq_impl.3} parent=1 // pred_fallthru
      _
    // Predicated region
    $region10: #{_seq2seq_impl.3} parent=1 // pred_check
      _
    $region11: #{_seq2seq_impl.3} parent=1 // pred_check_branch
      %31 = sbr.rel (0) target = $region13
    $region12: #{_seq2seq_impl.3} parent=1 // pred_region
      _
    $region13: #{_seq2seq_impl.3} parent=1 // pred_fallthru
      _
    // Predicated region
    $region14: #{_seq2seq_impl.3} parent=1 // pred_check
      _
    $region15: #{_seq2seq_impl.3} parent=1 // pred_check_branch
      %33 = sbr.rel (0) target = $region17
    $region16: #{_seq2seq_impl.3} parent=1 // pred_region
      _
    $region17: #{_seq2seq_impl.3} parent=1 // pred_fallthru
      _
    // Predicated region
    $region18: #{_seq2seq_impl.3} parent=1 // pred_check
      _
    $region19: #{_seq2seq_impl.3} parent=1 // pred_check_branch
      %35 = sbr.rel (0) target = $region21
    $region20: #{_seq2seq_impl.3} parent=1 // pred_region
      _
    $region21: #{_seq2seq_impl.3} parent=1 // pred_fallthru
      _
    // Predicated region
    $region22: #{_seq2seq_impl.3} parent=1 // pred_check
      _
    $region23: #{_seq2seq_impl.3} parent=1 // pred_check_branch
      %37 = sbr.rel (0) target = $region25
    $region24: #{_seq2seq_impl.3} parent=1 // pred_region
      _
    $region25: #{_seq2seq_impl.3} parent=1 // pred_fallthru
      _
    // Predicated region
    $region26: #{_seq2seq_impl.3} parent=1 // pred_check
      _
    $region27: #{_seq2seq_impl.3} parent=1 // pred_check_branch
      %39 = sbr.rel (0) target = $region29
    $region28: #{_seq2seq_impl.3} parent=1 // pred_region
      _
    $region29: #{_seq2seq_impl.3} parent=1 // pred_fallthru
      _
    // Predicated region
    $region30: #{_seq2seq_impl.3} parent=1 // pred_check
      _
    $region31: #{_seq2seq_impl.3} parent=1 // pred_check_branch
      %41 = sbr.rel (0) target = $region33
    $region32: #{_seq2seq_impl.3} parent=1 // pred_region
      _
    $region33: #{_seq2seq_impl.3} parent=1 // pred_fallthru
      _
    // Predicated region
    $region34: #{_seq2seq_impl.3} parent=1 // pred_check
      _
    $region35: #{_seq2seq_impl.3} parent=1 // pred_check_branch
      %43 = sbr.rel (0) target = $region37
    $region36: #{_seq2seq_impl.3} parent=1 // pred_region
      _
    $region37: #{_seq2seq_impl.3} parent=1 // pred_fallthru
      _
    // Predicated region
    $region38: #{_seq2seq_impl.3} parent=1 // pred_check
      _
    $region39: #{_seq2seq_impl.3} parent=1 // pred_check_branch
      %45 = sbr.rel (0) target = $region41
    $region40: #{_seq2seq_impl.3} parent=1 // pred_region
      _
    $region41: #{_seq2seq_impl.3} parent=1 // pred_fallthru
      _
    // Predicated region
    $region42: #{_seq2seq_impl.3} parent=1 // pred_check
      _
    $region43: #{_seq2seq_impl.3} parent=1 // pred_check_branch
      %47 = sbr.rel (0) target = $region45
    $region44: #{_seq2seq_impl.3} parent=1 // pred_region
      _
    $region45: #{_seq2seq_impl.3} parent=1 // pred_fallthru
      _
    // Predicated region
    $region46: #{_seq2seq_impl.3} parent=1 // pred_check
      _
    $region47: #{_seq2seq_impl.3} parent=1 // pred_check_branch
      %49 = sbr.rel (0) target = $region49
    $region48: #{_seq2seq_impl.3} parent=1 // pred_region
      _
    $region49: #{_seq2seq_impl.3} parent=1 // pred_fallthru
      _
    // Predicated region
    $region50: #{_seq2seq_impl.3} parent=1 // pred_check
      _
    $region51: #{_seq2seq_impl.3} parent=1 // pred_check_branch
      %51 = sbr.rel (0) target = $region53
    $region52: #{_seq2seq_impl.3} parent=1 // pred_region
      %53 = dma.done [#allocation4], 16
    $region53: #{_seq2seq_impl.3} parent=1 // pred_fallthru
      _
    %54 = sfence
    %v55 = vld [vmem:[%s2] sm:$0xff]
    %v56 = vld [vmem:[%s2 + $0x8] sm:$0xff]
    %v57 = vld [vmem:[%s8] sm:$0x1]
    %v58 = vld [vmem:[%s10] sm:$0x1]
    %v59 = vlaneseq
    %v60 = vand.u32 %v59, 127
    %61 = vst [vmem:[#allocation5] sm:$0x3] 0.0
    %v62 = vld [vmem:[%s3] sm:$0x3]
    %v63 = vld [vmem:[%s4] sm:$0x3]
    %v64 = vld [vmem:[%s1] sm:$0x3]
    loop: start=1, step=1, limit=8
    $region54: #{_seq2seq_impl.3} parent=1 // loop_pre_header
      _
    $region55: #{_seq2seq_impl.3} parent=1 // loop_header
      %s66 = sphi 1, %s70
      %p67 = scmp.ge.s32.totalorder %s66, 8
      %v71 = vphi %v62, %v323
      %v72 = vphi %v63, %v424
      %v73 = vphi %v64, %v420
    $region56: #{_seq2seq_impl.3} parent=1 // loop_header_branch
      %69 = sbr.rel (%p67) target = $region60
    $region57: #{_seq2seq_impl.3} parent=1 // loop_body
      %v75 = vrot.slane %v71, 1
      %v76 = vperm.slane %v71, 0
      %v77 = vperm.slane %v75, 0
      %v80 = vmul.f32 %v55, %v76
      %v81 = vmul.f32 %v56, %v77
      %vm82 = vcmask 261120
      %v83 = vsel %vm82, %v80, 0.0
      %84 = vadd.xlane.f32.xlu0 %v83
      %v85 = vpop.xlane.xlu0 %84
      %v86 = vsel %vm82, %v81, 0.0
      %87 = vadd.xlane.f32.xlu0 %v86
      %v88 = vpop.xlane.xlu0 %87
      %v91 = vperm.slane %v85, %v60
      %v92 = vperm.slane %v88, %v60
      %vm93 = vcmask 1041409
      %v94 = vsel %vm93, %v92, %v91
      %vm96 = vcmask 58368
      %v97 = vsel %vm96, %v94, -inf
      %98 = vmax.xlane.f32.xlu0 %v97
      %v99 = vpop.xlane.xlu0 %98
      %v101 = vperm.slane %v99, 0
      %v102 = vperm.slane %v99, 1
      %v105 = vsub.f32 %v85, %v101
      %v106 = vsub.f32 %v88, %v102
      %v107 = vmul.f32 %v105, 1.442695
      %v108 = vpow.pop %v107
      %v109 = vmul.f32 %v106, 1.442695
      %v110 = vpow.pop %v109
      %113 = vset.pattern.permute.xlu0 0
      %114 = vperm.xlu0 %113, %v108
      %v115 = vpop.permute.xlu0 %114
      %116 = vset.pattern.permute.xlu0 0
      %117 = vperm.xlu0 %116, %v110
      %v118 = vpop.permute.xlu0 %117
      %v119 = vperm.slane %v115, %v60
      %v120 = vperm.slane %v118, %v60
      %v121 = vsel %vm93, %v120, %v119
      %v123 = vsel %vm96, %v121, 0.0
      %124 = vadd.xlane.f32.xlu0 %v123
      %v125 = vpop.xlane.xlu0 %124
      %v127 = vperm.slane %v125, 0
      %v128 = vperm.slane %v125, 1
      %v131 = vrcp.pop %v127
      %v132 = vmul.f32 %v127, %v131
      %v133 = vsub.f32 1.0, %v132
      %v134 = vmul.f32 %v131, %v133
      %v135 = vadd.f32 %v131, %v134
      %vm136 = vweird.f32 %v127
      %vm137 = vweird.f32 %v131
      %vm138 = vmor %vm136, %vm137
      %v139 = vsel %vm138, %v131, %v135
      %v140 = vand.u32 2147483647, %v127
      %vm141 = vcmp.eq.f32.partialorder %v140, 8.507059e+37
      %v142 = vand.u32 %v127, 2147483648
      %v143 = vor.u32 1.1754944e-38, %v142
      %v144 = vsel %vm141, %v143, %v139
      %v145 = vmul.f32 %v108, %v144
      %v146 = vrcp.pop %v128
      %v147 = vmul.f32 %v128, %v146
      %v148 = vsub.f32 1.0, %v147
      %v149 = vmul.f32 %v146, %v148
      %v150 = vadd.f32 %v146, %v149
      %vm151 = vweird.f32 %v128
      %vm152 = vweird.f32 %v146
      %vm153 = vmor %vm151, %vm152
      %v154 = vsel %vm153, %v146, %v150
      %v155 = vand.u32 2147483647, %v128
      %vm156 = vcmp.eq.f32.partialorder %v155, 8.507059e+37
      %v157 = vand.u32 %v128, 2147483648
      %v158 = vor.u32 1.1754944e-38, %v157
      %v159 = vsel %vm156, %v158, %v154
      %v160 = vmul.f32 %v110, %v159
      %162 = vset.pattern.permute.xlu0 0
      %163 = vperm.xlu0 %162, %v145
      %v164 = vpop.permute.xlu0 %163
      %167 = vset.pattern.permute.xlu0 0
      %168 = vperm.xlu0 %167, %v160
      %v169 = vpop.permute.xlu0 %168
      %v171 = vmul.f32 %v164, %v55
      %v172 = vmul.f32 %v169, %v56
      %v173 = vsel %vm82, %v171, 0.0
      %v174 = vrot.slane %v173, 4
      %v175 = vadd.f32 %v173, %v174
      %v176 = vrot.slane %v175, 2
      %v177 = vadd.f32 %v175, %v176
      %v178 = vrot.slane %v177, 1
      %v179 = vadd.f32 %v177, %v178
      %v180 = vsel %vm82, %v172, 0.0
      %v181 = vrot.slane %v180, 4
      %v182 = vadd.f32 %v180, %v181
      %v183 = vrot.slane %v182, 2
      %v184 = vadd.f32 %v182, %v183
      %v185 = vrot.slane %v184, 1
      %v186 = vadd.f32 %v184, %v185
      %v187 = vld [vmem:[%s5] sm:$0xff]
      %v188 = vld [vmem:[%s5 + $0x8] sm:$0xff]
      %v189 = vld [vmem:[%s6] sm:$0xff]
      %v190 = vld [vmem:[%s6 + $0x8] sm:$0xff]
      %v191 = vld [vmem:[%s6 + $0x10] sm:$0xff]
      %v192 = vld [vmem:[%s6 + $0x18] sm:$0xff]
      %v195 = vsel %vm93, %v186, %v179
      %v196 = vsel %vm82, %v195, 0
      %198 = vmatpush.msra.mxu0 0.0
      %199 = vmatpush.msra.mxu0 0.0
      %200 = vmatpush.msra.mxu0 0.0
      %201 = vmatpush.msra.mxu0 0.0
      %202 = vmatpush.msra.mxu0 0.0
      %203 = vmatpush.msra.mxu0 0.0
      %204 = vmatpush.msra.mxu0 0.0
      %205 = vmatpush.msra.mxu0 0.0
      %206 = vmatpush.msra.mxu0 0.0
      %207 = vmatpush.msra.mxu0 0.0
      %208 = vmatpush.msra.mxu0 0.0
      %209 = vmatpush.msra.mxu0 0.0
      %210 = vmatpush.msra.mxu0 %v192
      %211 = vmatpush.msra.mxu0 %v191
      %212 = vmatpush.msra.mxu0 %v190
      %213 = vmatpush.msra.mxu0 %v189
      %214 = vmatmul.f32.gmra.mxu0 %v196
      %v215 = vpop.f32.mrf.mxu0
      %v216 = vadd.f32 0.0, %v215
      %217 = vdwg.mxu0
      %vm218 = vcmask 130048
      %v220 = vsel %vm218, %v73, 0
      %222 = vmatpush.msra.mxu0 0.0
      %223 = vmatpush.msra.mxu0 0.0
      %224 = vmatpush.msra.mxu0 0.0
      %225 = vmatpush.msra.mxu0 0.0
      %226 = vmatpush.msra.mxu0 0.0
      %227 = vmatpush.msra.mxu0 0.0
      %228 = vmatpush.msra.mxu0 0.0
      %229 = vmatpush.msra.mxu0 0.0
      %230 = vmatpush.msra.mxu0 0.0
      %231 = vmatpush.msra.mxu0 0.0
      %232 = vmatpush.msra.mxu0 0.0
      %233 = vmatpush.msra.mxu0 0.0
      %234 = vmatpush.msra.mxu0 0.0
      %235 = vmatpush.msra.mxu0 0.0
      %236 = vmatpush.msra.mxu0 %v188
      %237 = vmatpush.msra.mxu0 %v187
      %238 = vmatmul.f32.gmra.mxu0 %v220
      %v239 = vpop.f32.mrf.mxu0
      %v240 = vadd.f32 %v216, %v239
      %241 = vdwg.mxu0
      %v242 = vld [vmem:[%s7] sm:$0xff]
      %v243 = vld [vmem:[%s7 + $0x8] sm:$0xff]
      %v244 = vld [vmem:[%s7 + $0x10] sm:$0xff]
      %v245 = vld [vmem:[%s7 + $0x18] sm:$0xff]
      %v246 = vsel %vm82, %v71, 0
      %248 = vmatpush.msra.mxu0 0.0
      %249 = vmatpush.msra.mxu0 0.0
      %250 = vmatpush.msra.mxu0 0.0
      %251 = vmatpush.msra.mxu0 0.0
      %252 = vmatpush.msra.mxu0 0.0
      %253 = vmatpush.msra.mxu0 0.0
      %254 = vmatpush.msra.mxu0 0.0
      %255 = vmatpush.msra.mxu0 0.0
      %256 = vmatpush.msra.mxu0 0.0
      %257 = vmatpush.msra.mxu0 0.0
      %258 = vmatpush.msra.mxu0 0.0
      %259 = vmatpush.msra.mxu0 0.0
      %260 = vmatpush.msra.mxu0 %v245
      %261 = vmatpush.msra.mxu0 %v244
      %262 = vmatpush.msra.mxu0 %v243
      %263 = vmatpush.msra.mxu0 %v242
      %264 = vmatmul.f32.gmra.mxu0 %v246
      %v265 = vpop.f32.mrf.mxu0
      %v266 = vadd.f32 0.0, %v265
      %267 = vdwg.mxu0
      %v268 = vadd.f32 %v240, %v266
      %v270 = vperm.slane %v57, 0
      %v272 = vadd.f32 %v268, %v270
      %v273 = vxor.u32 %v272, 2147483648
      %v274 = vmul.f32 %v273, 1.442695
      %v275 = vpow.pop %v274
      %v276 = vadd.f32 %v275, 1.0
      %v277 = vrcp.pop %v276
      %v278 = vmul.f32 %v276, %v277
      %v279 = vsub.f32 1.0, %v278
      %v280 = vmul.f32 %v277, %v279
      %v281 = vadd.f32 %v277, %v280
      %vm282 = vweird.f32 %v276
      %vm283 = vweird.f32 %v277
      %vm284 = vmor %vm282, %vm283
      %v285 = vsel %vm284, %v277, %v281
      %v286 = vand.u32 2147483647, %v276
      %vm287 = vcmp.eq.f32.partialorder %v286, 8.507059e+37
      %v288 = vand.u32 %v276, 2147483648
      %v289 = vor.u32 1.1754944e-38, %v288
      %v290 = vsel %vm287, %v289, %v285
      %v291 = vmul.f32 1.0, %v290
      %v292 = vtanh.pop %v272
      %294 = vrot.lane.b32.xlu0 %v72, 32
      %v295 = vpop.permute.xlu0 %294
      %v297 = vmul.f32 %v291, %v295
      %299 = vrot.lane.b32.xlu0 %v292, 64
      %v300 = vpop.permute.xlu0 %299
      %v302 = vmul.f32 %v291, %v300
      %304 = vrot.lane.b32.xlu0 %v302, 32
      %v305 = vpop.permute.xlu0 %304
      %v307 = vadd.f32 %v297, %v305
      %v308 = vtanh.pop %v307
      %310 = vrot.lane.b32.xlu0 %v308, 64
      %v311 = vpop.permute.xlu0 %310
      %v313 = vmul.f32 %v291, %v311
      %v314 = vld [vmem:[%s9] sm:$0xff]
      %v315 = vld [vmem:[%s9 + $0x8] sm:$0xff]
      %v316 = vld [vmem:[%s9 + $0x10] sm:$0xff]
      %v317 = vld [vmem:[%s9 + $0x18] sm:$0xff]
      %v319 = vperm.slane %v58, 0
      %322 = vrot.lane.b32.xlu0 %v313, 32
      %v323 = vpop.permute.xlu0 %322
      %v324 = vsel %vm82, %v323, 0
      %326 = vmatpush.msra.mxu0 0.0
      %327 = vmatpush.msra.mxu0 0.0
      %328 = vmatpush.msra.mxu0 0.0
      %329 = vmatpush.msra.mxu0 0.0
      %330 = vmatpush.msra.mxu0 0.0
      %331 = vmatpush.msra.mxu0 0.0
      %332 = vmatpush.msra.mxu0 0.0
      %333 = vmatpush.msra.mxu0 0.0
      %334 = vmatpush.msra.mxu0 0.0
      %335 = vmatpush.msra.mxu0 0.0
      %336 = vmatpush.msra.mxu0 0.0
      %337 = vmatpush.msra.mxu0 0.0
      %338 = vmatpush.msra.mxu0 %v317
      %339 = vmatpush.msra.mxu0 %v316
      %340 = vmatpush.msra.mxu0 %v315
      %341 = vmatpush.msra.mxu0 %v314
      %342 = vmatmul.f32.gmra.mxu0 %v324
      %v343 = vpop.f32.mrf.mxu0
      %v344 = vadd.f32 %v319, %v343
      %345 = vdwg.mxu0
      %s346 = smul.u32 %s66, 2
      %s347 = scalar_lea.vmem [#allocation5], %s346
      %348 = vst [vmem:[%s347] sm:$0x3] %v344
      %vm349 = vcmp.lt.s32.totalorder %v60, 24
      %v350 = vsel %vm349, %v344, -1e+30
      %vm351 = vcmask 1041408
      %v352 = vsel %vm351, %v350, -inf
      %353 = vmax.xlane.f32.xlu0 %v352
      %v354 = vpop.xlane.xlu0 %353
      %vm355 = vcmp.ge.f32.partialorder %v350, %v354
      %v356 = vsel %vm355, %v60, 128
      %v357 = vsel %vm351, %v356, 2147483647
      %v358 = vand.u32 %v357, 65535
      %v359 = vshra.s32 %v357, 16
      %v360 = vcvt.s32.f32 %v358
      %v361 = vcvt.s32.f32 %v359
      %362 = vmin.xlane.f32.xlu0 %v361
      %v363 = vpop.xlane.xlu0 %362
      %vm364 = vcmp.eq.f32.partialorder %v361, %v363
      %v365 = vsel %vm364, %v360, inf
      %366 = vmin.xlane.f32.xlu0 %v365
      %v367 = vpop.xlane.xlu0 %366
      %v368 = vcvt.f32.s32 %v367
      %v369 = vcvt.f32.s32 %v363
      %v370 = vshll.u32 %v369, 16
      %v371 = vadd.s32 %v370, %v368
      %vm372 = vcmp.eq.s32.totalorder %v60, %v371
      %v373 = vsel %vm372, 1, 0
      %v374 = vcvt.s32.f32 %v373
      %v375 = vld [vmem:[%s11] sm:$0xff]
      %v376 = vld [vmem:[%s11 + $0x8] sm:$0xff]
      %v377 = vld [vmem:[%s11 + $0x10] sm:$0xff]
      %v378 = vld [vmem:[%s11 + $0x18] sm:$0xff]
      %v379 = vld [vmem:[%s11 + $0x20] sm:$0xff]
      %v380 = vld [vmem:[%s11 + $0x28] sm:$0xff]
      %v381 = vld [vmem:[%s11 + $0x30] sm:$0xff]
      %v382 = vld [vmem:[%s11 + $0x38] sm:$0xff]
      %v383 = vld [vmem:[%s11 + $0x40] sm:$0xff]
      %v384 = vld [vmem:[%s11 + $0x48] sm:$0xff]
      %v385 = vld [vmem:[%s11 + $0x50] sm:$0xff]
      %v386 = vld [vmem:[%s11 + $0x58] sm:$0xff]
      %v387 = vld [vmem:[%s11 + $0x60] sm:$0xff]
      %v388 = vld [vmem:[%s11 + $0x68] sm:$0xff]
      %v389 = vld [vmem:[%s11 + $0x70] sm:$0xff]
      %v390 = vld [vmem:[%s11 + $0x78] sm:$0xff]
      %391 = vmatpush.msra.mxu0 %v390
      %392 = vmatpush.msra.mxu0 %v389
      %393 = vmatpush.msra.mxu0 %v388
      %394 = vmatpush.msra.mxu0 %v387
      %395 = vmatpush.msra.mxu0 %v386
      %396 = vmatpush.msra.mxu0 %v385
      %397 = vmatpush.msra.mxu0 %v384
      %398 = vmatpush.msra.mxu0 %v383
      %399 = vmatpush.msra.mxu0 %v382
      %400 = vmatpush.msra.mxu0 %v381
      %401 = vmatpush.msra.mxu0 %v380
      %402 = vmatpush.msra.mxu0 %v379
      %403 = vmatpush.msra.mxu0 %v378
      %404 = vmatpush.msra.mxu0 %v377
      %405 = vmatpush.msra.mxu0 %v376
      %406 = vmatpush.msra.mxu0 %v375
      %407 = vmatmul.f32.gmra.mxu0 %v374
      %v408 = vpop.f32.mrf.mxu0
      %v409 = vadd.f32 0.0, %v408
      %410 = vdwg.mxu0
      %s411 = sld [smem:[#allocation2 + %s66]]
      %s412 = scvt.s32.f32 %s411
      %s413 = scalar_lea.vmem %s1, %s346
      %v414 = vld [vmem:[%s413] sm:$0x3]
      %v415 = vstv %s412
      %v416 = vmul.f32 %v415, %v414
      %s417 = ssub.f32 1.0, %s412
      %v418 = vstv %s417
      %v419 = vmul.f32 %v418, %v409
      %v420 = vadd.f32 %v416, %v419
      %423 = vrot.lane.b32.xlu0 %v307, 96
      %v424 = vpop.permute.xlu0 %423
    $region58: #{_seq2seq_impl.3} parent=1 // loop_footer
      %s70 = sadd.s32 1, %s66
    $region59: #{_seq2seq_impl.3} parent=1 // loop_footer_branch
      %65 = sbr.rel target = $region55
    $region60: #{_seq2seq_impl.3} parent=1 // loop_exit
      _
    // Predicated region
    $region61: #{_seq2seq_impl.3} parent=1 // pred_check
      _
    $region62: #{_seq2seq_impl.3} parent=1 // pred_check_branch
      %427 = sbr.rel (0) target = $region64
    $region63: #{_seq2seq_impl.3} parent=1 // pred_region
      %429 = vsyncadd [#allocation3], 0
      %s430 = sshll.u32 [#allocation5], 4
      %s431 = int_to_ptr.vmem [resolvable:$true] %s430
      %s432 = sshll.u32 %s12, 4
      %s433 = int_to_ptr.hbm [resolvable:$true] %s432
      %438 = dma.vmem_to_hbm [thread:$0]  %s431, 256, %s433, [#allocation3], 32, 32, 2
    $region64: #{_seq2seq_impl.3} parent=1 // pred_fallthru
      _
    // Predicated region
    $region65: #{_seq2seq_impl.3} parent=1 // pred_check
      _
    $region66: #{_seq2seq_impl.3} parent=1 // pred_check_branch
      %440 = sbr.rel (0) target = $region68
    $region67: #{_seq2seq_impl.3} parent=1 // pred_region
      %442 = dma.done [#allocation3], 256
    $region68: #{_seq2seq_impl.3} parent=1 // pred_fallthru
      _
    %443 = vsyncpa [#allocation3], 1
    %444 = vsyncpa [#allocation4], 1

</llo_original>
